<compile_context>
chip_gen: v7x
topology: tpu7x:2x2x1
jax: 0.10.0
libtpu: 0.0.40
codegen_flags: <defaults>
</compile_context>

<pallas_src>
import functools

import jax
import jax.numpy as jnp
from jax import lax
from jax.experimental import pallas as pl
from jax.experimental.pallas import tpu as pltpu

_LANE = 128


def _round_up(x, m):
    return ((x + m - 1) // m) * m


def _pad2d(a, rows, cols):
    return jnp.pad(a, ((0, rows - a.shape[0]), (0, cols - a.shape[1])))


def _tile_table(a_pad, tm, tk):
    """Per-(i,k) tile table for one adjacency: (nonzero mask, redirected block i/k).

    Redirected indices point at the most recently *nonzero* tile in grid
    traversal order (i outer, k inner), so empty tiles map to the same block as
    the previous step and their HBM DMA is skipped by the pipeline.
    """
    n_pad = a_pad.shape[0]
    ni, nk = n_pad // tm, n_pad // tk
    blocks = a_pad.reshape(ni, tm, nk, tk)
    nz = jnp.any(blocks != 0, axis=(1, 3)).reshape(-1)            # (ni*nk,)
    t_idx = jnp.arange(ni * nk, dtype=jnp.int32)
    last_nz = lax.cummax(jnp.where(nz, t_idx, jnp.int32(-1)))      # running last nonzero
    last_nz = jnp.maximum(last_nz, 0)                              # default block (0,0)
    bi = (last_nz // nk).astype(jnp.int32)
    bk = (last_nz % nk).astype(jnp.int32)
    return nz.astype(jnp.int32), bi, bk


def _multi_gcn_kernel(tbl_ref, a1_ref, a2_ref, xw1_ref, xw2_ref,
                      b1_ref, b2_ref, wo_ref, bo_ref,
                      z_ref, acc1_ref, acc2_ref, *, n_class, n_k_tiles):
    i = pl.program_id(0)
    k = pl.program_id(1)
    nk = pl.num_programs(1)
    t = i * n_k_tiles + k

    @pl.when(k == 0)
    def _init():
        acc1_ref[...] = jnp.zeros_like(acc1_ref)
        acc2_ref[...] = jnp.zeros_like(acc2_ref)

    # Aggregate A_tile @ (X W)_tile in f32; skip entirely when the A tile is empty
    # (its DMA was also deduplicated by the redirected index_map).
    @pl.when(tbl_ref[0, t] != 0)
    def _acc1():
        acc1_ref[...] += jnp.dot(a1_ref[...], xw1_ref[...],
                                 preferred_element_type=jnp.float32)

    @pl.when(tbl_ref[3, t] != 0)
    def _acc2():
        acc2_ref[...] += jnp.dot(a2_ref[...], xw2_ref[...],
                                 preferred_element_type=jnp.float32)

    @pl.when(k == nk - 1)
    def _finalize():
        # Bias + ReLU only after the full reduction (never on partial sums).
        h1 = jnp.maximum(acc1_ref[...] + b1_ref[...], 0.0)
        h2 = jnp.maximum(acc2_ref[...] + b2_ref[...], 0.0)

        # Fused concat + Linear readout: one (tm, 2*h_pad) @ (2*h_pad, c_pad) push.
        h = jnp.concatenate([h1, h2], axis=-1)
        logits = (jnp.dot(h, wo_ref[...], preferred_element_type=jnp.float32)
                  + bo_ref[...])

        # Mask padded class lanes so log_softmax only sees the real classes.
        lane = lax.broadcasted_iota(jnp.int32, logits.shape, 1)
        logits = jnp.where(lane < n_class, logits, jnp.full_like(logits, -1e30))

        m = jnp.max(logits, axis=-1, keepdims=True)
        s = logits - m
        lse = jnp.log(jnp.sum(jnp.exp(s), axis=-1, keepdims=True))
        z_ref[...] = s - lse


@functools.partial(jax.jit, static_argnames=("tm", "tk"))
def multi_gcn_forward(a1, a2, x, w1, b1, w2, b2, wo, bo, *, tm=1024, tk=512):
    n = x.shape[0]
    hidden = w1.shape[1]
    n_class = wo.shape[1]
    stream_dtype = jnp.bfloat16   # streamed operands; accumulation stays f32

    # Fused feature transform (tiny K contraction, one XLA matmul instead of two).
    w12 = jnp.concatenate([w1, w2], axis=1)                       # [in, 2H]
    xw = jnp.dot(x, w12, preferred_element_type=jnp.float32)      # [N, 2H]
    xw1, xw2 = xw[:, :hidden], xw[:, hidden:]

    # Lane padding for full-width MXU pushes and unmasked lane-dense stores.
    h_pad = _round_up(max(hidden, _LANE), _LANE)
    c_pad = _round_up(max(n_class, _LANE), _LANE)

    # Chip-aware VMEM budget (v7x: 64 MiB/TC; v5e/v6e: 128 MiB).
    try:
        info = pltpu.get_tpu_info()
        vmem_cap = int(getattr(info, "vmem_capacity_bytes", 64 * 1024 * 1024))
    except Exception:
        vmem_cap = 64 * 1024 * 1024
    vmem_limit = max(32 * 1024 * 1024, min(vmem_cap // 2, 64 * 1024 * 1024))

    # Tile sizing: row tile tm decoupled from reduction tile tk, tk | tm.
    n_base = _round_up(n, _LANE)
    tm = min(tm, n_base)
    tk = min(tk, tm)

    def _footprint(tm_, tk_):
        a_bytes = 2 * 2 * tm_ * tk_ * 2            # A1/A2, double-buffered, bf16
        xw_bytes = 2 * 2 * tk_ * h_pad * 2         # XW1/XW2, double-buffered, bf16
        acc_bytes = 2 * tm_ * h_pad * 4            # f32 accumulators
        out_bytes = 2 * tm_ * c_pad * 4            # output double-buffer
        w_bytes = 2 * (2 * h_pad * c_pad + h_pad + c_pad) * 4
        return a_bytes + xw_bytes + acc_bytes + out_bytes + w_bytes

    while tm > tk and _footprint(tm, tk) > vmem_limit:
        tm //= 2
    tm = max(tk, (tm // tk) * tk)                   # ensure tk | tm
    n_pad = _round_up(n, tm)                        # tk | tm | n_pad

    # Pad + cast the streamed operands; weights/biases stay f32 (epilogue only).
    a1p = _pad2d(a1, n_pad, n_pad).astype(stream_dtype)
    a2p = _pad2d(a2, n_pad, n_pad).astype(stream_dtype)
    xw1p = _pad2d(xw1, n_pad, h_pad).astype(stream_dtype)
    xw2p = _pad2d(xw2, n_pad, h_pad).astype(stream_dtype)
    b1p = jnp.pad(b1, (0, h_pad - hidden)).reshape(1, h_pad).astype(jnp.float32)
    b2p = jnp.pad(b2, (0, h_pad - hidden)).reshape(1, h_pad).astype(jnp.float32)
    wop = jnp.concatenate([_pad2d(wo[:hidden, :], h_pad, c_pad),
                           _pad2d(wo[hidden:, :], h_pad, c_pad)],
                          axis=0).astype(jnp.float32)             # [2*h_pad, c_pad]
    bop = jnp.pad(bo, (0, c_pad - n_class)).reshape(1, c_pad).astype(jnp.float32)

    n_i, n_k = n_pad // tm, n_pad // tk
    grid = (n_i, n_k)

    # Block-sparse tile table (scalar-prefetched into SMEM):
    # rows: [mask1, bi1, bk1, mask2, bi2, bk2], flat index = i*n_k + k.
    m1, bi1, bk1 = _tile_table(a1p, tm, tk)
    m2, bi2, bk2 = _tile_table(a2p, tm, tk)
    tbl = jnp.stack([m1, bi1, bk1, m2, bi2, bk2], axis=0).astype(jnp.int32)

    # Advisory cost so XLA schedules the hoisted x@W / slicing around the call.
    flops = 2 * 2 * n_pad * n_pad * h_pad + 2 * n_pad * (2 * h_pad) * c_pad
    bytes_accessed = (2 * n_pad * n_pad * 2                # A1, A2 bf16 stream
                      + n_i * n_pad * h_pad * 2 * 2        # XW re-streamed per row tile
                      + n_pad * c_pad * 4)                 # output
    cost = pl.CostEstimate(flops=flops, transcendentals=n_pad * c_pad,
                           bytes_accessed=bytes_accessed)

    kernel = functools.partial(_multi_gcn_kernel, n_class=n_class, n_k_tiles=n_k)

    z_pad = pl.pallas_call(
        kernel,
        out_shape=jax.ShapeDtypeStruct((n_pad, c_pad), jnp.float32),
        grid_spec=pltpu.PrefetchScalarGridSpec(
            num_scalar_prefetch=1,
            grid=grid,
            in_specs=[
                # A tiles: empty tiles redirect to the previously fetched block
                # (same index as last step => pipeline skips the DMA).
                pl.BlockSpec((tm, tk),
                             lambda i, k, t: (t[1, i * n_k + k], t[2, i * n_k + k])),
                pl.BlockSpec((tm, tk),
                             lambda i, k, t: (t[4, i * n_k + k], t[5, i * n_k + k])),
                pl.BlockSpec((tk, h_pad), lambda i, k, t: (k, 0)),    # XW1 tile
                pl.BlockSpec((tk, h_pad), lambda i, k, t: (k, 0)),    # XW2 tile
                pl.BlockSpec((1, h_pad), lambda i, k, t: (0, 0)),     # b1
                pl.BlockSpec((1, h_pad), lambda i, k, t: (0, 0)),     # b2
                pl.BlockSpec((2 * h_pad, c_pad), lambda i, k, t: (0, 0)),  # stacked Wo
                pl.BlockSpec((1, c_pad), lambda i, k, t: (0, 0)),     # bo
            ],
            out_specs=pl.BlockSpec((tm, c_pad), lambda i, k, t: (i, 0)),
            scratch_shapes=[
                pltpu.VMEM((tm, h_pad), jnp.float32),   # branch-1 accumulator
                pltpu.VMEM((tm, h_pad), jnp.float32),   # branch-2 accumulator
            ],
        ),
        compiler_params=pltpu.CompilerParams(
            # Row axis shards across the 2 TensorCores on v7x; no-op on v5e/v6e.
            dimension_semantics=("parallel", "arbitrary"),
            vmem_limit_bytes=vmem_limit,
        ),
        cost_estimate=cost,
    )(tbl, a1p, a2p, xw1p, xw2p, b1p, b2p, wop, bop)

    return z_pad[:n, :n_class]


def _normalized_adjacency(key, n):
    """Random undirected graph with self-loops, D^{-1/2} (A+I) D^{-1/2}."""
    a = (jax.random.uniform(key, (n, n)) < 0.3).astype(jnp.float32)
    a = jnp.maximum(a, a.T)                              # symmetrize
    a = jnp.maximum(a, jnp.eye(n, dtype=jnp.float32))    # add self-loops
    deg = jnp.sum(a, axis=1)
    d_inv_sqrt = 1.0 / jnp.sqrt(deg)
    return a * d_inv_sqrt[:, None] * d_inv_sqrt[None, :]


def _reference_forward(a1, a2, x, w1, b1, w2, b2, wo, bo):
    h1 = jax.nn.relu(a1 @ (x @ w1) + b1)
    h2 = jax.nn.relu(a2 @ (x @ w2) + b2)
    h = jnp.concatenate([h1, h2], axis=1)
    logits = h @ wo + bo
    return jax.nn.log_softmax(logits, axis=1)


if __name__ == "__main__":
    # Small shapes consistent with the module: N nodes, in_size features,
    # hidden_size, n_class classes, n_layers=2 (no hidden convs).
    N, IN_SIZE, HIDDEN, N_CLASS = 16, 8, 32, 4

    key = jax.random.PRNGKey(0)
    k_g1, k_g2, k_x, k_w1, k_b1, k_w2, k_b2, k_wo, k_bo = jax.random.split(key, 9)

    a1 = _normalized_adjacency(k_g1, N)
    a2 = _normalized_adjacency(k_g2, N)
    x = jax.random.normal(k_x, (N, IN_SIZE), dtype=jnp.float32)

    def uniform(k, shape, scale):
        return jax.random.uniform(k, shape, jnp.float32, -scale, scale)

    w1 = uniform(k_w1, (IN_SIZE, HIDDEN), (6.0 / (IN_SIZE + HIDDEN)) ** 0.5)
    b1 = jnp.zeros((HIDDEN,), jnp.float32)
    w2 = uniform(k_w2, (IN_SIZE, HIDDEN), (6.0 / (IN_SIZE + HIDDEN)) ** 0.5)
    b2 = jnp.zeros((HIDDEN,), jnp.float32)
    wo = uniform(k_wo, (2 * HIDDEN, N_CLASS), (1.0 / (2 * HIDDEN)) ** 0.5)
    bo = uniform(k_bo, (N_CLASS,), (1.0 / (2 * HIDDEN)) ** 0.5)

    # TODO(synk): F.dropout with self.training is treated as identity (eval mode).

    z = multi_gcn_forward(a1, a2, x, w1, b1, w2, b2, wo, bo)
    z = jax.block_until_ready(z)

    z_ref = _reference_forward(a1, a2, x, w1, b1, w2, b2, wo, bo)
    assert z.shape == (N, N_CLASS)
    # Tolerance reflects bf16 streaming of A/XW (accumulation is f32).
    assert jnp.allclose(z, z_ref, atol=5e-2, rtol=5e-2), "mismatch vs reference"

    print("KERNEL_OK")
</pallas_src>

<mosaic_0001>
module attributes {stable_mosaic.version = 11 : i64} {
  func.func @_multi_gcn_kernel(%arg0: i32, %arg1: i32, %arg2: memref<6x1xi32, #tpu.memory_space<smem>>, %arg3: memref<128x128xbf16, #tpu.memory_space<vmem>>, %arg4: memref<128x128xbf16, #tpu.memory_space<vmem>>, %arg5: memref<128x128xbf16, #tpu.memory_space<vmem>>, %arg6: memref<128x128xbf16, #tpu.memory_space<vmem>>, %arg7: memref<1x128xf32, #tpu.memory_space<vmem>>, %arg8: memref<1x128xf32, #tpu.memory_space<vmem>>, %arg9: memref<256x128xf32, #tpu.memory_space<vmem>>, %arg10: memref<1x128xf32, #tpu.memory_space<vmem>>, %arg11: memref<128x128xf32, #tpu.memory_space<vmem>>, %arg12: memref<128x128xf32, #tpu.memory_space<vmem>>, %arg13: memref<128x128xf32, #tpu.memory_space<vmem>>) attributes {dimension_semantics = [#tpu.dimension_semantics<parallel>, #tpu.dimension_semantics<arbitrary>], iteration_bounds = array<i64: 1, 1>, scalar_prefetch = 1 : i64, scratch_operands = 2 : i64, tpu.core_type = #tpu.core_type<tc>, window_params = [{transform_indices = @transform_0, window_bounds = array<i64: 128, 128>}, {transform_indices = @transform_1, window_bounds = array<i64: 128, 128>}, {transform_indices = @transform_2, window_bounds = array<i64: 128, 128>}, {transform_indices = @transform_3, window_bounds = array<i64: 128, 128>}, {pipeline_mode = #tpu.pipeline_mode<synchronous>, transform_indices = @transform_4, window_bounds = array<i64: 1, 128>}, {pipeline_mode = #tpu.pipeline_mode<synchronous>, transform_indices = @transform_5, window_bounds = array<i64: 1, 128>}, {pipeline_mode = #tpu.pipeline_mode<synchronous>, transform_indices = @transform_6, window_bounds = array<i64: 256, 128>}, {pipeline_mode = #tpu.pipeline_mode<synchronous>, transform_indices = @transform_7, window_bounds = array<i64: 1, 128>}, {transform_indices = @transform_8, window_bounds = array<i64: 128, 128>}]} {
    %c1_i32 = arith.constant 1 : i32
    %0 = arith.muli %arg0, %c1_i32 : i32
    %1 = arith.addi %0, %arg1 : i32
    %c0_i32 = arith.constant 0 : i32
    %2 = arith.cmpi eq, %arg1, %c0_i32 : i32
    %3 = arith.extui %2 : i1 to i32
    %c0_i32_0 = arith.constant 0 : i32
    %4 = arith.cmpi ne, %3, %c0_i32_0 : i32
    scf.if %4 {
      %cst = arith.constant 0.000000e+00 : f32
      %18 = vector.broadcast %cst : f32 to vector<128x128xf32>
      %c0_7 = arith.constant 0 : index
      %c0_8 = arith.constant 0 : index
      %19 = vector.load %arg12[%c0_7, %c0_8] : memref<128x128xf32, #tpu.memory_space<vmem>>, vector<128x128xf32>
      tpu.vector_store %arg12[%c0_7, %c0_8], %18 {strides = array<i32>} : memref<128x128xf32, #tpu.memory_space<vmem>>, vector<128x128xf32>,
      %cst_9 = arith.constant 0.000000e+00 : f32
      %20 = vector.broadcast %cst_9 : f32 to vector<128x128xf32>
      %c0_10 = arith.constant 0 : index
      %c0_11 = arith.constant 0 : index
      %21 = vector.load %arg13[%c0_10, %c0_11] : memref<128x128xf32, #tpu.memory_space<vmem>>, vector<128x128xf32>
      tpu.vector_store %arg13[%c0_10, %c0_11], %20 {strides = array<i32>} : memref<128x128xf32, #tpu.memory_space<vmem>>, vector<128x128xf32>,
    } else {
    }
    %c0 = arith.constant 0 : index
    %5 = arith.index_cast %1 : i32 to index
    %6 = memref.load %arg2[%c0, %5] : memref<6x1xi32, #tpu.memory_space<smem>>
    %c0_i32_1 = arith.constant 0 : i32
    %7 = arith.cmpi ne, %6, %c0_i32_1 : i32
    %8 = arith.extui %7 : i1 to i32
    %c0_i32_2 = arith.constant 0 : i32
    %9 = arith.cmpi ne, %8, %c0_i32_2 : i32
    scf.if %9 {
      %c0_7 = arith.constant 0 : index
      %c0_8 = arith.constant 0 : index
      %18 = vector.load %arg12[%c0_7, %c0_8] : memref<128x128xf32, #tpu.memory_space<vmem>>, vector<128x128xf32>
      %c0_9 = arith.constant 0 : index
      %c0_10 = arith.constant 0 : index
      %19 = vector.load %arg3[%c0_9, %c0_10] : memref<128x128xbf16, #tpu.memory_space<vmem>>, vector<128x128xbf16>
      %c0_11 = arith.constant 0 : index
      %c0_12 = arith.constant 0 : index
      %20 = vector.load %arg5[%c0_11, %c0_12] : memref<128x128xbf16, #tpu.memory_space<vmem>>, vector<128x128xbf16>
      %cst = arith.constant dense<0.000000e+00> : vector<128x128xf32>
      %21 = tpu.matmul %19, %20, %cst {dimension_numbers = #tpu.dot_dimension_numbers<[1], [0], [0], [1], [0, 0, 1, 1], [], []>} : vector<128x128xbf16>, vector<128x128xbf16>, vector<128x128xf32> -> vector<128x128xf32>
      %22 = arith.addf %18, %21 : vector<128x128xf32>
      %c0_13 = arith.constant 0 : index
      %c0_14 = arith.constant 0 : index
      %23 = vector.load %arg12[%c0_13, %c0_14] : memref<128x128xf32, #tpu.memory_space<vmem>>, vector<128x128xf32>
      tpu.vector_store %arg12[%c0_13, %c0_14], %22 {strides = array<i32>} : memref<128x128xf32, #tpu.memory_space<vmem>>, vector<128x128xf32>,
    } else {
    }
    %c3 = arith.constant 3 : index
    %10 = arith.index_cast %1 : i32 to index
    %11 = memref.load %arg2[%c3, %10] : memref<6x1xi32, #tpu.memory_space<smem>>
    %c0_i32_3 = arith.constant 0 : i32
    %12 = arith.cmpi ne, %11, %c0_i32_3 : i32
    %13 = arith.extui %12 : i1 to i32
    %c0_i32_4 = arith.constant 0 : i32
    %14 = arith.cmpi ne, %13, %c0_i32_4 : i32
    scf.if %14 {
      %c0_7 = arith.constant 0 : index
      %c0_8 = arith.constant 0 : index
      %18 = vector.load %arg13[%c0_7, %c0_8] : memref<128x128xf32, #tpu.memory_space<vmem>>, vector<128x128xf32>
      %c0_9 = arith.constant 0 : index
      %c0_10 = arith.constant 0 : index
      %19 = vector.load %arg4[%c0_9, %c0_10] : memref<128x128xbf16, #tpu.memory_space<vmem>>, vector<128x128xbf16>
      %c0_11 = arith.constant 0 : index
      %c0_12 = arith.constant 0 : index
      %20 = vector.load %arg6[%c0_11, %c0_12] : memref<128x128xbf16, #tpu.memory_space<vmem>>, vector<128x128xbf16>
      %cst = arith.constant dense<0.000000e+00> : vector<128x128xf32>
      %21 = tpu.matmul %19, %20, %cst {dimension_numbers = #tpu.dot_dimension_numbers<[1], [0], [0], [1], [0, 0, 1, 1], [], []>} : vector<128x128xbf16>, vector<128x128xbf16>, vector<128x128xf32> -> vector<128x128xf32>
      %22 = arith.addf %18, %21 : vector<128x128xf32>
      %c0_13 = arith.constant 0 : index
      %c0_14 = arith.constant 0 : index
      %23 = vector.load %arg13[%c0_13, %c0_14] : memref<128x128xf32, #tpu.memory_space<vmem>>, vector<128x128xf32>
      tpu.vector_store %arg13[%c0_13, %c0_14], %22 {strides = array<i32>} : memref<128x128xf32, #tpu.memory_space<vmem>>, vector<128x128xf32>,
    } else {
    }
    %c0_i32_5 = arith.constant 0 : i32
    %15 = arith.cmpi eq, %arg1, %c0_i32_5 : i32
    %16 = arith.extui %15 : i1 to i32
    %c0_i32_6 = arith.constant 0 : i32
    %17 = arith.cmpi ne, %16, %c0_i32_6 : i32
    scf.if %17 {
      %c0_7 = arith.constant 0 : index
      %c0_8 = arith.constant 0 : index
      %18 = vector.load %arg12[%c0_7, %c0_8] : memref<128x128xf32, #tpu.memory_space<vmem>>, vector<128x128xf32>
      %c0_9 = arith.constant 0 : index
      %c0_10 = arith.constant 0 : index
      %19 = vector.load %arg7[%c0_9, %c0_10] : memref<1x128xf32, #tpu.memory_space<vmem>>, vector<1x128xf32>
      %20 = vector.broadcast %19 : vector<1x128xf32> to vector<128x128xf32>
      %21 = arith.addf %18, %20 : vector<128x128xf32>
      %cst = arith.constant 0.000000e+00 : f32
      %22 = vector.broadcast %cst : f32 to vector<128x128xf32>
      %23 = arith.maximumf %21, %22 : vector<128x128xf32>
      %c0_11 = arith.constant 0 : index
      %c0_12 = arith.constant 0 : index
      %24 = vector.load %arg13[%c0_11, %c0_12] : memref<128x128xf32, #tpu.memory_space<vmem>>, vector<128x128xf32>
      %c0_13 = arith.constant 0 : index
      %c0_14 = arith.constant 0 : index
      %25 = vector.load %arg8[%c0_13, %c0_14] : memref<1x128xf32, #tpu.memory_space<vmem>>, vector<1x128xf32>
      %26 = vector.broadcast %25 : vector<1x128xf32> to vector<128x128xf32>
      %27 = arith.addf %24, %26 : vector<128x128xf32>
      %cst_15 = arith.constant 0.000000e+00 : f32
      %28 = vector.broadcast %cst_15 : f32 to vector<128x128xf32>
      %29 = arith.maximumf %27, %28 : vector<128x128xf32>
      %30 = tpu.concatenate %23, %29 in 1 : vector<128x128xf32>, vector<128x128xf32> -> vector<128x256xf32>
      %c0_16 = arith.constant 0 : index
      %c0_17 = arith.constant 0 : index
      %31 = vector.load %arg9[%c0_16, %c0_17] : memref<256x128xf32, #tpu.memory_space<vmem>>, vector<256x128xf32>
      %cst_18 = arith.constant dense<0.000000e+00> : vector<128x128xf32>
      %32 = tpu.matmul %30, %31, %cst_18 {dimension_numbers = #tpu.dot_dimension_numbers<[1], [0], [0], [1], [0, 0, 1, 1], [], []>} : vector<128x256xf32>, vector<256x128xf32>, vector<128x128xf32> -> vector<128x128xf32>
      %c0_19 = arith.constant 0 : index
      %c0_20 = arith.constant 0 : index
      %33 = vector.load %arg10[%c0_19, %c0_20] : memref<1x128xf32, #tpu.memory_space<vmem>>, vector<1x128xf32>
      %34 = vector.broadcast %33 : vector<1x128xf32> to vector<128x128xf32>
      %35 = arith.addf %32, %34 : vector<128x128xf32>
      %36 = tpu.iota {dimensions = array<i32: 1>} : vector<128x128xi32>
      %c4_i32 = arith.constant 4 : i32
      %37 = vector.broadcast %c4_i32 : i32 to vector<128x128xi32>
      %38 = arith.cmpi slt, %36, %37 : vector<128x128xi32>
      %cst_21 = arith.constant -1.000000e+30 : f32
      %39 = vector.broadcast %cst_21 : f32 to vector<128x128xf32>
      %40 = arith.select %38, %35, %39 : vector<128x128xi1>, vector<128x128xf32>
      %cst_22 = arith.constant dense<0xFF800000> : vector<128xf32>
      %41 = vector.multi_reduction <maximumf>, %40, %cst_22 [1] : vector<128x128xf32> to vector<128xf32>
      %42 = vector.shape_cast %41 : vector<128xf32> to vector<128x1xf32>
      %43 = vector.broadcast %42 : vector<128x1xf32> to vector<128x128xf32>
      %44 = arith.subf %40, %43 : vector<128x128xf32>
      %45 = math.exp %44 : vector<128x128xf32>
      %cst_23 = arith.constant dense<0.000000e+00> : vector<128xf32>
      %46 = vector.multi_reduction <add>, %45, %cst_23 [1] : vector<128x128xf32> to vector<128xf32>
      %47 = vector.shape_cast %46 : vector<128xf32> to vector<128x1xf32>
      %48 = math.log %47 : vector<128x1xf32>
      %49 = vector.broadcast %48 : vector<128x1xf32> to vector<128x128xf32>
      %50 = arith.subf %44, %49 : vector<128x128xf32>
      %c0_24 = arith.constant 0 : index
      %c0_25 = arith.constant 0 : index
      %51 = vector.load %arg11[%c0_24, %c0_25] : memref<128x128xf32, #tpu.memory_space<vmem>>, vector<128x128xf32>
      tpu.vector_store %arg11[%c0_24, %c0_25], %50 {strides = array<i32>} : memref<128x128xf32, #tpu.memory_space<vmem>>, vector<128x128xf32>,
    } else {
    }
    return
  }
  func.func @transform_0(%arg0: i32, %arg1: i32, %arg2: memref<6x1xi32, #tpu.memory_space<smem>>) -> (i32, i32) {
    %c1_i32 = arith.constant 1 : i32
    %0 = arith.muli %arg0, %c1_i32 : i32
    %1 = arith.addi %0, %arg1 : i32
    %c1 = arith.constant 1 : index
    %2 = arith.index_cast %1 : i32 to index
    %3 = memref.load %arg2[%c1, %2] : memref<6x1xi32, #tpu.memory_space<smem>>
    %c1_i32_0 = arith.constant 1 : i32
    %4 = arith.muli %arg0, %c1_i32_0 : i32
    %5 = arith.addi %4, %arg1 : i32
    %c2 = arith.constant 2 : index
    %6 = arith.index_cast %5 : i32 to index
    %7 = memref.load %arg2[%c2, %6] : memref<6x1xi32, #tpu.memory_space<smem>>
    %c0_i32 = arith.constant 0 : i32
    return %3, %7 : i32, i32
  }
  func.func @transform_1(%arg0: i32, %arg1: i32, %arg2: memref<6x1xi32, #tpu.memory_space<smem>>) -> (i32, i32) {
    %c1_i32 = arith.constant 1 : i32
    %0 = arith.muli %arg0, %c1_i32 : i32
    %1 = arith.addi %0, %arg1 : i32
    %c4 = arith.constant 4 : index
    %2 = arith.index_cast %1 : i32 to index
    %3 = memref.load %arg2[%c4, %2] : memref<6x1xi32, #tpu.memory_space<smem>>
    %c1_i32_0 = arith.constant 1 : i32
    %4 = arith.muli %arg0, %c1_i32_0 : i32
    %5 = arith.addi %4, %arg1 : i32
    %c5 = arith.constant 5 : index
    %6 = arith.index_cast %5 : i32 to index
    %7 = memref.load %arg2[%c5, %6] : memref<6x1xi32, #tpu.memory_space<smem>>
    %c0_i32 = arith.constant 0 : i32
    return %3, %7 : i32, i32
  }
  func.func @transform_2(%arg0: i32, %arg1: i32, %arg2: memref<6x1xi32, #tpu.memory_space<smem>>) -> (i32, i32) {
    %c0_i32 = arith.constant 0 : i32
    %c0_i32_0 = arith.constant 0 : i32
    return %arg1, %c0_i32 : i32, i32
  }
  func.func @transform_3(%arg0: i32, %arg1: i32, %arg2: memref<6x1xi32, #tpu.memory_space<smem>>) -> (i32, i32) {
    %c0_i32 = arith.constant 0 : i32
    %c0_i32_0 = arith.constant 0 : i32
    return %arg1, %c0_i32 : i32, i32
  }
  func.func @transform_4(%arg0: i32, %arg1: i32, %arg2: memref<6x1xi32, #tpu.memory_space<smem>>) -> (i32, i32) {
    %c0_i32 = arith.constant 0 : i32
    %c0_i32_0 = arith.constant 0 : i32
    %c0_i32_1 = arith.constant 0 : i32
    return %c0_i32, %c0_i32_0 : i32, i32
  }
  func.func @transform_5(%arg0: i32, %arg1: i32, %arg2: memref<6x1xi32, #tpu.memory_space<smem>>) -> (i32, i32) {
    %c0_i32 = arith.constant 0 : i32
    %c0_i32_0 = arith.constant 0 : i32
    %c0_i32_1 = arith.constant 0 : i32
    return %c0_i32, %c0_i32_0 : i32, i32
  }
  func.func @transform_6(%arg0: i32, %arg1: i32, %arg2: memref<6x1xi32, #tpu.memory_space<smem>>) -> (i32, i32) {
    %c0_i32 = arith.constant 0 : i32
    %c0_i32_0 = arith.constant 0 : i32
    %c0_i32_1 = arith.constant 0 : i32
    return %c0_i32, %c0_i32_0 : i32, i32
  }
  func.func @transform_7(%arg0: i32, %arg1: i32, %arg2: memref<6x1xi32, #tpu.memory_space<smem>>) -> (i32, i32) {
    %c0_i32 = arith.constant 0 : i32
    %c0_i32_0 = arith.constant 0 : i32
    %c0_i32_1 = arith.constant 0 : i32
    return %c0_i32, %c0_i32_0 : i32, i32
  }
  func.func @transform_8(%arg0: i32, %arg1: i32, %arg2: memref<6x1xi32, #tpu.memory_space<smem>>) -> (i32, i32) {
    %c0_i32 = arith.constant 0 : i32
    %c0_i32_0 = arith.constant 0 : i32
    return %arg0, %c0_i32 : i32, i32
  }
}

</mosaic_0001>

<llo_original>
// kernel: multi_gcn_forward.1
$region0: #{multi_gcn_forward.1}
  #allocation0 [shape = 'u32[]', space=smem, size = 0x4, offset = 0x4, fixed_abs, tag = 'smem constant byte address 0x4 - core index']
  #allocation1 [shape = 'u32[144,128]{1,0:T(1,128)}', space=vmem, size = 0x12000, scoped, tag = 'internal scratch']
  #allocation2 [shape = 'f32[128,128]{1,0:T(8,128)}', space=vmem, size = 0x10000, scoped, tag = 'scratch operand']
  #allocation3 [shape = 'f32[128,128]{1,0:T(8,128)}', space=vmem, size = 0x10000, scoped, tag = 'scratch operand']
  #allocation4 [shape = 's32[1]{0}', space=sflag, size = 0x4, scoped, tag = 'scoped memory for multi_gcn_forward.1']
  #allocation5 [shape = 'u8[4096]{0}', space=smem, size = 0x1000, scoped, tag = 'prefetched SMEM operand 0']
  %s0 = inlined_call_operand.vmem [shape: s32[6,1], index: 0, kind: input, shape index: {}]
  %s1 = inlined_call_operand.vmem [shape: bf16[128,128], index: 1, kind: input, shape index: {}]
  %s2 = inlined_call_operand.vmem [shape: bf16[128,128], index: 2, kind: input, shape index: {}]
  %s3 = inlined_call_operand.vmem [shape: bf16[128,128], index: 3, kind: input, shape index: {}]
  %s4 = inlined_call_operand.vmem [shape: bf16[128,128], index: 4, kind: input, shape index: {}]
  %s5 = inlined_call_operand.vmem [shape: f32[1,128], index: 5, kind: input, shape index: {}]
  %s6 = inlined_call_operand.vmem [shape: f32[1,128], index: 6, kind: input, shape index: {}]
  %s7 = inlined_call_operand.vmem [shape: f32[256,128], index: 7, kind: input, shape index: {}]
  %s8 = inlined_call_operand.vmem [shape: f32[1,128], index: 8, kind: input, shape index: {}]
  %s9 = inlined_call_operand.vmem [shape: f32[128,128], index: 9, kind: output, shape index: {}]
  %s10 = sld [smem:[#allocation0]]
  $region58: #{multi_gcn_forward.1} parent=0
    _
  %s12 = ssub.s32 1, %s10
  %s13 = scalar_select 0, %s12, %s10
  %s14 = sshll.u32 %s0, 4
  %s15 = int_to_ptr.vmem [resolvable:$true] %s14
  %17 = dma.vmem_to_smem %s15, 128, [#allocation5], [#allocation4]
  %18 = dma.done [#allocation4], 128
  %19 = sfence
  // Predicated region
  $region2: #{multi_gcn_forward.1} parent=0 // pred_check
    _
  $region3: #{multi_gcn_forward.1} parent=0 // pred_check_branch
    %21 = sbr.rel (0) target = $region5
  $region4: #{multi_gcn_forward.1} parent=0 // pred_region
    %s22 = sadd.s32 0, 0
    %s23 = sshra.s32 %s22, 7
    %s24 = sand.u32 %s22, 127
    %s25 = sadd.s32 %s23, 1
    %s26 = smul.u32 %s25, 128
    %s27 = sshra.s32 %s22, 7
    %s28 = sand.u32 %s22, 127
    %s29 = sadd.s32 %s26, %s28
    %s30 = sld [smem:[#allocation5 + %s29]]
    %s31 = sadd.s32 %s23, 2
    %s32 = smul.u32 %s31, 128
    %s33 = sadd.s32 %s32, %s28
    %s34 = sld [smem:[#allocation5 + %s33]]
    %s35 = smul.u32 16, %s30
    %p36 = scmp.lt.s32.totalorder %s35, 15
    %s37 = scalar_select %p36, %s35, 15
    %p38 = scmp.lt.s32.totalorder %s34, 0
    %s39 = scalar_select %p38, %s34, 0
    %s40 = sadd.s32 %s39, %s37
    %s41 = smul.addr %s40, 4
    %s42 = scalar_lea.vmem %s1, %s41
    %s43 = sadd.s32 0, 0
    %s44 = sshra.s32 %s43, 7
    %s45 = sand.u32 %s43, 127
    %s46 = sadd.s32 %s44, 1
    %s47 = smul.u32 %s46, 128
    %s48 = sshra.s32 %s43, 7
    %s49 = sand.u32 %s43, 127
    %s50 = sadd.s32 %s47, %s49
    %s51 = sld [smem:[#allocation5 + %s50]]
    %s52 = sadd.s32 %s44, 2
    %s53 = smul.u32 %s52, 128
    %s54 = sadd.s32 %s53, %s49
    %s55 = sld [smem:[#allocation5 + %s54]]
    %s56 = smul.u32 16, %s51
  $region5: #{multi_gcn_forward.1} parent=0 // pred_fallthru
    _
  // Predicated region
  $region6: #{multi_gcn_forward.1} parent=0 // pred_check
    _
  $region7: #{multi_gcn_forward.1} parent=0 // pred_check_branch
    %58 = sbr.rel (0) target = $region9
  $region8: #{multi_gcn_forward.1} parent=0 // pred_region
    %s59 = sadd.s32 0, 0
    %s60 = sshra.s32 %s59, 7
    %s61 = sand.u32 %s59, 127
    %s62 = sadd.s32 %s60, 4
    %s63 = smul.u32 %s62, 128
    %s64 = sshra.s32 %s59, 7
    %s65 = sand.u32 %s59, 127
    %s66 = sadd.s32 %s63, %s65
    %s67 = sld [smem:[#allocation5 + %s66]]
    %s68 = sadd.s32 %s60, 5
    %s69 = smul.u32 %s68, 128
    %s70 = sadd.s32 %s69, %s65
    %s71 = sld [smem:[#allocation5 + %s70]]
    %s72 = smul.u32 16, %s67
    %p73 = scmp.lt.s32.totalorder %s72, 15
    %s74 = scalar_select %p73, %s72, 15
    %p75 = scmp.lt.s32.totalorder %s71, 0
    %s76 = scalar_select %p75, %s71, 0
    %s77 = sadd.s32 %s76, %s74
    %s78 = smul.addr %s77, 4
    %s79 = scalar_lea.vmem %s2, %s78
    %s80 = sadd.s32 0, 0
    %s81 = sshra.s32 %s80, 7
    %s82 = sand.u32 %s80, 127
    %s83 = sadd.s32 %s81, 4
    %s84 = smul.u32 %s83, 128
    %s85 = sshra.s32 %s80, 7
    %s86 = sand.u32 %s80, 127
    %s87 = sadd.s32 %s84, %s86
    %s88 = sld [smem:[#allocation5 + %s87]]
    %s89 = sadd.s32 %s81, 5
    %s90 = smul.u32 %s89, 128
    %s91 = sadd.s32 %s90, %s86
    %s92 = sld [smem:[#allocation5 + %s91]]
    %s93 = smul.u32 16, %s88
  $region9: #{multi_gcn_forward.1} parent=0 // pred_fallthru
    _
  // Predicated region
  $region10: #{multi_gcn_forward.1} parent=0 // pred_check
    _
  $region11: #{multi_gcn_forward.1} parent=0 // pred_check_branch
    %95 = sbr.rel (0) target = $region13
  $region12: #{multi_gcn_forward.1} parent=0 // pred_region
    _
  $region13: #{multi_gcn_forward.1} parent=0 // pred_fallthru
    _
  // Predicated region
  $region14: #{multi_gcn_forward.1} parent=0 // pred_check
    _
  $region15: #{multi_gcn_forward.1} parent=0 // pred_check_branch
    %97 = sbr.rel (0) target = $region17
  $region16: #{multi_gcn_forward.1} parent=0 // pred_region
    _
  $region17: #{multi_gcn_forward.1} parent=0 // pred_fallthru
    _
  // Predicated region
  $region18: #{multi_gcn_forward.1} parent=0 // pred_check
    _
  $region19: #{multi_gcn_forward.1} parent=0 // pred_check_branch
    %99 = sbr.rel (0) target = $region21
  $region20: #{multi_gcn_forward.1} parent=0 // pred_region
    _
  $region21: #{multi_gcn_forward.1} parent=0 // pred_fallthru
    _
  // Predicated region
  $region22: #{multi_gcn_forward.1} parent=0 // pred_check
    _
  $region23: #{multi_gcn_forward.1} parent=0 // pred_check_branch
    %101 = sbr.rel (0) target = $region25
  $region24: #{multi_gcn_forward.1} parent=0 // pred_region
    _
  $region25: #{multi_gcn_forward.1} parent=0 // pred_fallthru
    _
  // Predicated region
  $region26: #{multi_gcn_forward.1} parent=0 // pred_check
    _
  $region27: #{multi_gcn_forward.1} parent=0 // pred_check_branch
    %103 = sbr.rel (0) target = $region29
  $region28: #{multi_gcn_forward.1} parent=0 // pred_region
    _
  $region29: #{multi_gcn_forward.1} parent=0 // pred_fallthru
    _
  // Predicated region
  $region30: #{multi_gcn_forward.1} parent=0 // pred_check
    _
  $region31: #{multi_gcn_forward.1} parent=0 // pred_check_branch
    %105 = sbr.rel (0) target = $region33
  $region32: #{multi_gcn_forward.1} parent=0 // pred_region
    _
  $region33: #{multi_gcn_forward.1} parent=0 // pred_fallthru
    _
  %s106 = sadd.s32 0, 0
  %s107 = sshra.s32 %s106, 7
  %s108 = sand.u32 %s106, 127
  %s109 = sadd.s32 %s107, 1
  %s110 = smul.u32 %s109, 128
  %s111 = sshra.s32 %s106, 7
  %s112 = sand.u32 %s106, 127
  %s113 = sadd.s32 %s110, %s112
  %s114 = sld [smem:[#allocation5 + %s113]]
  %s115 = sadd.s32 %s107, 2
  %s116 = smul.u32 %s115, 128
  %s117 = sadd.s32 %s116, %s112
  %s118 = sld [smem:[#allocation5 + %s117]]
  %s119 = smul.u32 16, %s114
  %p120 = scmp.lt.s32.totalorder %s119, 15
  %s121 = scalar_select %p120, %s119, 15
  %p122 = scmp.lt.s32.totalorder %s118, 0
  %s123 = scalar_select %p122, %s118, 0
  %s124 = sadd.s32 %s123, %s121
  %s125 = smul.addr %s124, 4
  %s126 = scalar_lea.vmem %s1, %s125
  %s127 = sadd.s32 0, 0
  %s128 = sshra.s32 %s127, 7
  %s129 = sand.u32 %s127, 127
  %s130 = sadd.s32 %s128, 4
  %s131 = smul.u32 %s130, 128
  %s132 = sshra.s32 %s127, 7
  %s133 = sand.u32 %s127, 127
  %s134 = sadd.s32 %s131, %s133
  %s135 = sld [smem:[#allocation5 + %s134]]
  %s136 = sadd.s32 %s128, 5
  %s137 = smul.u32 %s136, 128
  %s138 = sadd.s32 %s137, %s133
  %s139 = sld [smem:[#allocation5 + %s138]]
  %s140 = smul.u32 16, %s135
  %p141 = scmp.lt.s32.totalorder %s140, 15
  %s142 = scalar_select %p141, %s140, 15
  %p143 = scmp.lt.s32.totalorder %s139, 0
  %s144 = scalar_select %p143, %s139, 0
  %s145 = sadd.s32 %s144, %s142
  %s146 = smul.addr %s145, 4
  %s147 = scalar_lea.vmem %s2, %s146
  %s148 = sadd.s32 0, 0
  %s149 = sshra.s32 %s148, 7
  %s150 = sand.u32 %s148, 127
  %s151 = sadd.s32 %s149, 1
  %s152 = smul.u32 %s151, 128
  %s153 = sshra.s32 %s148, 7
  %s154 = sand.u32 %s148, 127
  %s155 = sadd.s32 %s152, %s154
  %s156 = sld [smem:[#allocation5 + %s155]]
  %s157 = sadd.s32 %s149, 2
  %s158 = smul.u32 %s157, 128
  %s159 = sadd.s32 %s158, %s154
  %s160 = sld [smem:[#allocation5 + %s159]]
  %s161 = smul.u32 16, %s156
  %p162 = scmp.lt.s32.totalorder %s161, 15
  %s163 = scalar_select %p162, %s161, 15
  %p164 = scmp.lt.s32.totalorder %s160, 0
  %s165 = scalar_select %p164, %s160, 0
  %s166 = sadd.s32 %s165, %s163
  %s167 = smul.addr %s166, 4
  %s168 = scalar_lea.vmem %s1, %s167
  %s169 = sadd.s32 0, 0
  %s170 = sshra.s32 %s169, 7
  %s171 = sand.u32 %s169, 127
  %s172 = sadd.s32 %s170, 1
  %s173 = smul.u32 %s172, 128
  %s174 = sshra.s32 %s169, 7
  %s175 = sand.u32 %s169, 127
  %s176 = sadd.s32 %s173, %s175
  %s177 = sld [smem:[#allocation5 + %s176]]
  %s178 = sadd.s32 %s170, 2
  %s179 = smul.u32 %s178, 128
  %s180 = sadd.s32 %s179, %s175
  %s181 = sld [smem:[#allocation5 + %s180]]
  %s182 = smul.u32 16, %s177
  %s183 = sadd.s32 0, 0
  %s184 = sshra.s32 %s183, 7
  %s185 = sand.u32 %s183, 127
  %s186 = sadd.s32 %s184, 4
  %s187 = smul.u32 %s186, 128
  %s188 = sshra.s32 %s183, 7
  %s189 = sand.u32 %s183, 127
  %s190 = sadd.s32 %s187, %s189
  %s191 = sld [smem:[#allocation5 + %s190]]
  %s192 = sadd.s32 %s184, 5
  %s193 = smul.u32 %s192, 128
  %s194 = sadd.s32 %s193, %s189
  %s195 = sld [smem:[#allocation5 + %s194]]
  %s196 = smul.u32 16, %s191
  %p197 = scmp.lt.s32.totalorder %s196, 15
  %s198 = scalar_select %p197, %s196, 15
  %p199 = scmp.lt.s32.totalorder %s195, 0
  %s200 = scalar_select %p199, %s195, 0
  %s201 = sadd.s32 %s200, %s198
  %s202 = smul.addr %s201, 4
  %s203 = scalar_lea.vmem %s2, %s202
  %s204 = sadd.s32 0, 0
  %s205 = sshra.s32 %s204, 7
  %s206 = sand.u32 %s204, 127
  %s207 = sadd.s32 %s205, 4
  %s208 = smul.u32 %s207, 128
  %s209 = sshra.s32 %s204, 7
  %s210 = sand.u32 %s204, 127
  %s211 = sadd.s32 %s208, %s210
  %s212 = sld [smem:[#allocation5 + %s211]]
  %s213 = sadd.s32 %s205, 5
  %s214 = smul.u32 %s213, 128
  %s215 = sadd.s32 %s214, %s210
  %s216 = sld [smem:[#allocation5 + %s215]]
  %s217 = smul.u32 16, %s212
  %s219 = sadd.s32 0, 0
  %p220 = scmp.eq.s32.totalorder 0, 0
  // Predicated region
  $region34: #{multi_gcn_forward.1} parent=0 // pred_check
    %p221 = pneg %p220
  $region35: #{multi_gcn_forward.1} parent=0 // pred_check_branch
    %223 = sbr.rel (%p221) target = $region37
  $region36: #{multi_gcn_forward.1} parent=0 // pred_region
    %224 = vst [vmem:[#allocation2] sm:$0xff] 0.0
    %225 = vst [vmem:[#allocation2 + $0x8] sm:$0xff] 0.0
    %226 = vst [vmem:[#allocation2 + $0x10] sm:$0xff] 0.0
    %227 = vst [vmem:[#allocation2 + $0x18] sm:$0xff] 0.0
    %228 = vst [vmem:[#allocation2 + $0x20] sm:$0xff] 0.0
    %229 = vst [vmem:[#allocation2 + $0x28] sm:$0xff] 0.0
    %230 = vst [vmem:[#allocation2 + $0x30] sm:$0xff] 0.0
    %231 = vst [vmem:[#allocation2 + $0x38] sm:$0xff] 0.0
    %232 = vst [vmem:[#allocation2 + $0x40] sm:$0xff] 0.0
    %233 = vst [vmem:[#allocation2 + $0x48] sm:$0xff] 0.0
    %234 = vst [vmem:[#allocation2 + $0x50] sm:$0xff] 0.0
    %235 = vst [vmem:[#allocation2 + $0x58] sm:$0xff] 0.0
    %236 = vst [vmem:[#allocation2 + $0x60] sm:$0xff] 0.0
    %237 = vst [vmem:[#allocation2 + $0x68] sm:$0xff] 0.0
    %238 = vst [vmem:[#allocation2 + $0x70] sm:$0xff] 0.0
    %239 = vst [vmem:[#allocation2 + $0x78] sm:$0xff] 0.0
    %240 = vst [vmem:[#allocation3] sm:$0xff] 0.0
    %241 = vst [vmem:[#allocation3 + $0x8] sm:$0xff] 0.0
    %242 = vst [vmem:[#allocation3 + $0x10] sm:$0xff] 0.0
    %243 = vst [vmem:[#allocation3 + $0x18] sm:$0xff] 0.0
    %244 = vst [vmem:[#allocation3 + $0x20] sm:$0xff] 0.0
    %245 = vst [vmem:[#allocation3 + $0x28] sm:$0xff] 0.0
    %246 = vst [vmem:[#allocation3 + $0x30] sm:$0xff] 0.0
    %247 = vst [vmem:[#allocation3 + $0x38] sm:$0xff] 0.0
    %248 = vst [vmem:[#allocation3 + $0x40] sm:$0xff] 0.0
    %249 = vst [vmem:[#allocation3 + $0x48] sm:$0xff] 0.0
    %250 = vst [vmem:[#allocation3 + $0x50] sm:$0xff] 0.0
    %251 = vst [vmem:[#allocation3 + $0x58] sm:$0xff] 0.0
    %252 = vst [vmem:[#allocation3 + $0x60] sm:$0xff] 0.0
    %253 = vst [vmem:[#allocation3 + $0x68] sm:$0xff] 0.0
    %254 = vst [vmem:[#allocation3 + $0x70] sm:$0xff] 0.0
    %255 = vst [vmem:[#allocation3 + $0x78] sm:$0xff] 0.0
  $region37: #{multi_gcn_forward.1} parent=0 // pred_fallthru
    _
  %s256 = sld [smem:[#allocation5 + %s219]]
  %p257 = scmp.ne.s32.totalorder %s256, 0
  // Predicated region
  $region38: #{multi_gcn_forward.1} parent=0 // pred_check
    %p258 = pneg %p257
  $region39: #{multi_gcn_forward.1} parent=0 // pred_check_branch
    %260 = sbr.rel (%p258) target = $region41
  $region40: #{multi_gcn_forward.1} parent=0 // pred_region
    %v261 = vld [vmem:[#allocation2] sm:$0xff]
    %v262 = vld [vmem:[#allocation2 + $0x8] sm:$0xff]
    %v263 = vld [vmem:[#allocation2 + $0x10] sm:$0xff]
    %v264 = vld [vmem:[#allocation2 + $0x18] sm:$0xff]
    %v265 = vld [vmem:[#allocation2 + $0x20] sm:$0xff]
    %v266 = vld [vmem:[#allocation2 + $0x28] sm:$0xff]
    %v267 = vld [vmem:[#allocation2 + $0x30] sm:$0xff]
    %v268 = vld [vmem:[#allocation2 + $0x38] sm:$0xff]
    %v269 = vld [vmem:[#allocation2 + $0x40] sm:$0xff]
    %v270 = vld [vmem:[#allocation2 + $0x48] sm:$0xff]
    %v271 = vld [vmem:[#allocation2 + $0x50] sm:$0xff]
    %v272 = vld [vmem:[#allocation2 + $0x58] sm:$0xff]
    %v273 = vld [vmem:[#allocation2 + $0x60] sm:$0xff]
    %v274 = vld [vmem:[#allocation2 + $0x68] sm:$0xff]
    %v275 = vld [vmem:[#allocation2 + $0x70] sm:$0xff]
    %v276 = vld [vmem:[#allocation2 + $0x78] sm:$0xff]
    %v277 = vld [vmem:[%s168] sm:$0xf]
    %v278 = vld [vmem:[%s168 + $0x4] sm:$0xf]
    %v279 = vld [vmem:[%s168 + $0x8] sm:$0xf]
    %v280 = vld [vmem:[%s168 + $0xc] sm:$0xf]
    %v281 = vld [vmem:[%s168 + $0x10] sm:$0xf]
    %v282 = vld [vmem:[%s168 + $0x14] sm:$0xf]
    %v283 = vld [vmem:[%s168 + $0x18] sm:$0xf]
    %v284 = vld [vmem:[%s168 + $0x1c] sm:$0xf]
    %v285 = vld [vmem:[%s168 + $0x20] sm:$0xf]
    %v286 = vld [vmem:[%s168 + $0x24] sm:$0xf]
    %v287 = vld [vmem:[%s168 + $0x28] sm:$0xf]
    %v288 = vld [vmem:[%s168 + $0x2c] sm:$0xf]
    %v289 = vld [vmem:[%s168 + $0x30] sm:$0xf]
    %v290 = vld [vmem:[%s168 + $0x34] sm:$0xf]
    %v291 = vld [vmem:[%s168 + $0x38] sm:$0xf]
    %v292 = vld [vmem:[%s168 + $0x3c] sm:$0xf]
    %v293 = vld [vmem:[%s3] sm:$0xf]
    %v294 = vld [vmem:[%s3 + $0x4] sm:$0xf]
    %v295 = vld [vmem:[%s3 + $0x8] sm:$0xf]
    %v296 = vld [vmem:[%s3 + $0xc] sm:$0xf]
    %v297 = vld [vmem:[%s3 + $0x10] sm:$0xf]
    %v298 = vld [vmem:[%s3 + $0x14] sm:$0xf]
    %v299 = vld [vmem:[%s3 + $0x18] sm:$0xf]
    %v300 = vld [vmem:[%s3 + $0x1c] sm:$0xf]
    %v301 = vld [vmem:[%s3 + $0x20] sm:$0xf]
    %v302 = vld [vmem:[%s3 + $0x24] sm:$0xf]
    %v303 = vld [vmem:[%s3 + $0x28] sm:$0xf]
    %v304 = vld [vmem:[%s3 + $0x2c] sm:$0xf]
    %v305 = vld [vmem:[%s3 + $0x30] sm:$0xf]
    %v306 = vld [vmem:[%s3 + $0x34] sm:$0xf]
    %v307 = vld [vmem:[%s3 + $0x38] sm:$0xf]
    %v308 = vld [vmem:[%s3 + $0x3c] sm:$0xf]
    %v325 = vunpack.c.l.b16 %v277
    %v326 = vunpack.c.l.b16 %v278
    %v327 = vunpack.c.l.b16 %v279
    %v328 = vunpack.c.l.b16 %v280
    %v329 = vunpack.c.l.b16 %v281
    %v330 = vunpack.c.l.b16 %v282
    %v331 = vunpack.c.l.b16 %v283
    %v332 = vunpack.c.l.b16 %v284
    %v333 = vunpack.c.l.b16 %v285
    %v334 = vunpack.c.l.b16 %v286
    %v335 = vunpack.c.l.b16 %v287
    %v336 = vunpack.c.l.b16 %v288
    %v337 = vunpack.c.l.b16 %v289
    %v338 = vunpack.c.l.b16 %v290
    %v339 = vunpack.c.l.b16 %v291
    %v340 = vunpack.c.l.b16 %v292
    %v341 = vpack.c.b16 %v326, %v325
    %v342 = vpack.c.b16 %v328, %v327
    %v343 = vpack.c.b16 %v330, %v329
    %v344 = vpack.c.b16 %v332, %v331
    %v345 = vpack.c.b16 %v334, %v333
    %v346 = vpack.c.b16 %v336, %v335
    %v347 = vpack.c.b16 %v338, %v337
    %v348 = vpack.c.b16 %v340, %v339
    %v373 = vunpack.c.l.b16 %v293
    %v374 = vunpack.c.l.b16 %v294
    %v375 = vunpack.c.l.b16 %v295
    %v376 = vunpack.c.l.b16 %v296
    %v377 = vunpack.c.l.b16 %v297
    %v378 = vunpack.c.l.b16 %v298
    %v379 = vunpack.c.l.b16 %v299
    %v380 = vunpack.c.l.b16 %v300
    %v381 = vunpack.c.l.b16 %v301
    %v382 = vunpack.c.l.b16 %v302
    %v383 = vunpack.c.l.b16 %v303
    %v384 = vunpack.c.l.b16 %v304
    %v385 = vunpack.c.l.b16 %v305
    %v386 = vunpack.c.l.b16 %v306
    %v387 = vunpack.c.l.b16 %v307
    %v388 = vunpack.c.l.b16 %v308
    %v389 = vpack.c.b16 %v374, %v373
    %v390 = vpack.c.b16 %v376, %v375
    %v391 = vpack.c.b16 %v378, %v377
    %v392 = vpack.c.b16 %v380, %v379
    %v393 = vpack.c.b16 %v382, %v381
    %v394 = vpack.c.b16 %v384, %v383
    %v395 = vpack.c.b16 %v386, %v385
    %v396 = vpack.c.b16 %v388, %v387
    %405 = vmatprep.subr.bf16.mxu0 0
    %406 = vmatpush1.bf16.msra.mxu0 %v389
    %407 = vmatprep.subr.bf16.mxu0 0
    %408 = vmatpush1.bf16.msra.mxu0 %v390
    %409 = vmatprep.subr.bf16.mxu0 0
    %410 = vmatpush1.bf16.msra.mxu0 %v391
    %411 = vmatprep.subr.bf16.mxu0 0
    %412 = vmatpush1.bf16.msra.mxu0 %v392
    %413 = vmatprep.subr.bf16.mxu0 0
    %414 = vmatpush1.bf16.msra.mxu0 %v393
    %415 = vmatprep.subr.bf16.mxu0 0
    %416 = vmatpush1.bf16.msra.mxu0 %v394
    %417 = vmatprep.subr.bf16.mxu0 0
    %418 = vmatpush1.bf16.msra.mxu0 %v395
    %419 = vmatprep.subr.bf16.mxu0 0
    %420 = vmatpush1.bf16.msra.mxu0 %v396
    %421 = vmatprep.subr.bf16.mxu0 0
    %422 = vmatpush1.bf16.msra.mxu0 0
    %423 = vmatprep.subr.bf16.mxu0 0
    %424 = vmatpush1.bf16.msra.mxu0 0
    %425 = vmatprep.subr.bf16.mxu0 0
    %426 = vmatpush1.bf16.msra.mxu0 0
    %427 = vmatprep.subr.bf16.mxu0 0
    %428 = vmatpush1.bf16.msra.mxu0 0
    %429 = vmatprep.subr.bf16.mxu0 0
    %430 = vmatpush1.bf16.msra.mxu0 0
    %431 = vmatprep.subr.bf16.mxu0 0
    %432 = vmatpush1.bf16.msra.mxu0 0
    %433 = vmatprep.subr.bf16.mxu0 0
    %434 = vmatpush1.bf16.msra.mxu0 0
    %435 = vmatprep.subr.bf16.mxu0 0
    %436 = vmatpush1.bf16.msra.mxu0 0
    %437 = vmatprep.mubr.bf16.mxu0 0
    %438 = vmatmul.mubr.bf16.gmra.mrb[0].mxu0 %v341
    %v439 = vpop.f32.mrb[0].mxu0
    %v440 = vadd.f32 0.0, %v439
    %v441 = vpop.f32.mrb[0].mxu0
    %v442 = vpop.f32.mrb[0].mxu0
    %v443 = vadd.f32 0.0, %v442
    %v444 = vpop.f32.mrb[0].mxu0
    %445 = vmatprep.mubr.bf16.mxu0 0
    %446 = vmatmul.mubr.bf16.gmra.mrb[0].mxu0 %v342
    %v447 = vpop.f32.mrb[0].mxu0
    %v448 = vadd.f32 0.0, %v447
    %v449 = vpop.f32.mrb[0].mxu0
    %v450 = vpop.f32.mrb[0].mxu0
    %v451 = vadd.f32 0.0, %v450
    %v452 = vpop.f32.mrb[0].mxu0
    %453 = vmatprep.mubr.bf16.mxu0 0
    %454 = vmatmul.mubr.bf16.gmra.mrb[0].mxu0 %v343
    %v455 = vpop.f32.mrb[0].mxu0
    %v456 = vadd.f32 0.0, %v455
    %v457 = vpop.f32.mrb[0].mxu0
    %v458 = vpop.f32.mrb[0].mxu0
    %v459 = vadd.f32 0.0, %v458
    %v460 = vpop.f32.mrb[0].mxu0
    %461 = vmatprep.mubr.bf16.mxu0 0
    %462 = vmatmul.mubr.bf16.gmra.mrb[0].mxu0 %v344
    %v463 = vpop.f32.mrb[0].mxu0
    %v464 = vadd.f32 0.0, %v463
    %v465 = vpop.f32.mrb[0].mxu0
    %v466 = vpop.f32.mrb[0].mxu0
    %v467 = vadd.f32 0.0, %v466
    %v468 = vpop.f32.mrb[0].mxu0
    %469 = vmatprep.mubr.bf16.mxu0 0
    %470 = vmatmul.mubr.bf16.gmra.mrb[0].mxu0 %v345
    %v471 = vpop.f32.mrb[0].mxu0
    %v472 = vadd.f32 0.0, %v471
    %v473 = vpop.f32.mrb[0].mxu0
    %v474 = vpop.f32.mrb[0].mxu0
    %v475 = vadd.f32 0.0, %v474
    %v476 = vpop.f32.mrb[0].mxu0
    %477 = vmatprep.mubr.bf16.mxu0 0
    %478 = vmatmul.mubr.bf16.gmra.mrb[0].mxu0 %v346
    %v479 = vpop.f32.mrb[0].mxu0
    %v480 = vadd.f32 0.0, %v479
    %v481 = vpop.f32.mrb[0].mxu0
    %v482 = vpop.f32.mrb[0].mxu0
    %v483 = vadd.f32 0.0, %v482
    %v484 = vpop.f32.mrb[0].mxu0
    %485 = vmatprep.mubr.bf16.mxu0 0
    %486 = vmatmul.mubr.bf16.gmra.mrb[0].mxu0 %v347
    %v487 = vpop.f32.mrb[0].mxu0
    %v488 = vadd.f32 0.0, %v487
    %v489 = vpop.f32.mrb[0].mxu0
    %v490 = vpop.f32.mrb[0].mxu0
    %v491 = vadd.f32 0.0, %v490
    %v492 = vpop.f32.mrb[0].mxu0
    %493 = vmatprep.mubr.bf16.mxu0 0
    %494 = vmatmul.mubr.bf16.gmra.mrb[0].mxu0 %v348
    %v495 = vpop.f32.mrb[0].mxu0
    %v496 = vadd.f32 0.0, %v495
    %v497 = vpop.f32.mrb[0].mxu0
    %v498 = vpop.f32.mrb[0].mxu0
    %v499 = vadd.f32 0.0, %v498
    %v500 = vpop.f32.mrb[0].mxu0
    %501 = vdwg.mxu0
    %v502 = vadd.f32 %v261, %v440
    %v503 = vadd.f32 %v262, %v443
    %v504 = vadd.f32 %v263, %v448
    %v505 = vadd.f32 %v264, %v451
    %v506 = vadd.f32 %v265, %v456
    %v507 = vadd.f32 %v266, %v459
    %v508 = vadd.f32 %v267, %v464
    %v509 = vadd.f32 %v268, %v467
    %v510 = vadd.f32 %v269, %v472
    %v511 = vadd.f32 %v270, %v475
    %v512 = vadd.f32 %v271, %v480
    %v513 = vadd.f32 %v272, %v483
    %v514 = vadd.f32 %v273, %v488
    %v515 = vadd.f32 %v274, %v491
    %v516 = vadd.f32 %v275, %v496
    %v517 = vadd.f32 %v276, %v499
    %518 = vst [vmem:[#allocation2] sm:$0xff] %v502
    %519 = vst [vmem:[#allocation2 + $0x8] sm:$0xff] %v503
    %520 = vst [vmem:[#allocation2 + $0x10] sm:$0xff] %v504
    %521 = vst [vmem:[#allocation2 + $0x18] sm:$0xff] %v505
    %522 = vst [vmem:[#allocation2 + $0x20] sm:$0xff] %v506
    %523 = vst [vmem:[#allocation2 + $0x28] sm:$0xff] %v507
    %524 = vst [vmem:[#allocation2 + $0x30] sm:$0xff] %v508
    %525 = vst [vmem:[#allocation2 + $0x38] sm:$0xff] %v509
    %526 = vst [vmem:[#allocation2 + $0x40] sm:$0xff] %v510
    %527 = vst [vmem:[#allocation2 + $0x48] sm:$0xff] %v511
    %528 = vst [vmem:[#allocation2 + $0x50] sm:$0xff] %v512
    %529 = vst [vmem:[#allocation2 + $0x58] sm:$0xff] %v513
    %530 = vst [vmem:[#allocation2 + $0x60] sm:$0xff] %v514
    %531 = vst [vmem:[#allocation2 + $0x68] sm:$0xff] %v515
    %532 = vst [vmem:[#allocation2 + $0x70] sm:$0xff] %v516
    %533 = vst [vmem:[#allocation2 + $0x78] sm:$0xff] %v517
  $region41: #{multi_gcn_forward.1} parent=0 // pred_fallthru
    _
  %s534 = sshra.s32 %s219, 7
  %s535 = sand.u32 %s219, 127
  %s536 = sadd.s32 %s534, 3
  %s537 = smul.u32 %s536, 128
  %s538 = sshra.s32 %s219, 7
  %s539 = sand.u32 %s219, 127
  %s540 = sadd.s32 %s537, %s539
  %s541 = sld [smem:[#allocation5 + %s540]]
  %p542 = scmp.ne.s32.totalorder %s541, 0
  // Predicated region
  $region42: #{multi_gcn_forward.1} parent=0 // pred_check
    %p543 = pneg %p542
  $region43: #{multi_gcn_forward.1} parent=0 // pred_check_branch
    %545 = sbr.rel (%p543) target = $region45
  $region44: #{multi_gcn_forward.1} parent=0 // pred_region
    %v546 = vld [vmem:[#allocation3] sm:$0xff]
    %v547 = vld [vmem:[#allocation3 + $0x8] sm:$0xff]
    %v548 = vld [vmem:[#allocation3 + $0x10] sm:$0xff]
    %v549 = vld [vmem:[#allocation3 + $0x18] sm:$0xff]
    %v550 = vld [vmem:[#allocation3 + $0x20] sm:$0xff]
    %v551 = vld [vmem:[#allocation3 + $0x28] sm:$0xff]
    %v552 = vld [vmem:[#allocation3 + $0x30] sm:$0xff]
    %v553 = vld [vmem:[#allocation3 + $0x38] sm:$0xff]
    %v554 = vld [vmem:[#allocation3 + $0x40] sm:$0xff]
    %v555 = vld [vmem:[#allocation3 + $0x48] sm:$0xff]
    %v556 = vld [vmem:[#allocation3 + $0x50] sm:$0xff]
    %v557 = vld [vmem:[#allocation3 + $0x58] sm:$0xff]
    %v558 = vld [vmem:[#allocation3 + $0x60] sm:$0xff]
    %v559 = vld [vmem:[#allocation3 + $0x68] sm:$0xff]
    %v560 = vld [vmem:[#allocation3 + $0x70] sm:$0xff]
    %v561 = vld [vmem:[#allocation3 + $0x78] sm:$0xff]
    %v562 = vld [vmem:[%s203] sm:$0xf]
    %v563 = vld [vmem:[%s203 + $0x4] sm:$0xf]
    %v564 = vld [vmem:[%s203 + $0x8] sm:$0xf]
    %v565 = vld [vmem:[%s203 + $0xc] sm:$0xf]
    %v566 = vld [vmem:[%s203 + $0x10] sm:$0xf]
    %v567 = vld [vmem:[%s203 + $0x14] sm:$0xf]
    %v568 = vld [vmem:[%s203 + $0x18] sm:$0xf]
    %v569 = vld [vmem:[%s203 + $0x1c] sm:$0xf]
    %v570 = vld [vmem:[%s203 + $0x20] sm:$0xf]
    %v571 = vld [vmem:[%s203 + $0x24] sm:$0xf]
    %v572 = vld [vmem:[%s203 + $0x28] sm:$0xf]
    %v573 = vld [vmem:[%s203 + $0x2c] sm:$0xf]
    %v574 = vld [vmem:[%s203 + $0x30] sm:$0xf]
    %v575 = vld [vmem:[%s203 + $0x34] sm:$0xf]
    %v576 = vld [vmem:[%s203 + $0x38] sm:$0xf]
    %v577 = vld [vmem:[%s203 + $0x3c] sm:$0xf]
    %v578 = vld [vmem:[%s4] sm:$0xf]
    %v579 = vld [vmem:[%s4 + $0x4] sm:$0xf]
    %v580 = vld [vmem:[%s4 + $0x8] sm:$0xf]
    %v581 = vld [vmem:[%s4 + $0xc] sm:$0xf]
    %v582 = vld [vmem:[%s4 + $0x10] sm:$0xf]
    %v583 = vld [vmem:[%s4 + $0x14] sm:$0xf]
    %v584 = vld [vmem:[%s4 + $0x18] sm:$0xf]
    %v585 = vld [vmem:[%s4 + $0x1c] sm:$0xf]
    %v586 = vld [vmem:[%s4 + $0x20] sm:$0xf]
    %v587 = vld [vmem:[%s4 + $0x24] sm:$0xf]
    %v588 = vld [vmem:[%s4 + $0x28] sm:$0xf]
    %v589 = vld [vmem:[%s4 + $0x2c] sm:$0xf]
    %v590 = vld [vmem:[%s4 + $0x30] sm:$0xf]
    %v591 = vld [vmem:[%s4 + $0x34] sm:$0xf]
    %v592 = vld [vmem:[%s4 + $0x38] sm:$0xf]
    %v593 = vld [vmem:[%s4 + $0x3c] sm:$0xf]
    %v610 = vunpack.c.l.b16 %v562
    %v611 = vunpack.c.l.b16 %v563
    %v612 = vunpack.c.l.b16 %v564
    %v613 = vunpack.c.l.b16 %v565
    %v614 = vunpack.c.l.b16 %v566
    %v615 = vunpack.c.l.b16 %v567
    %v616 = vunpack.c.l.b16 %v568
    %v617 = vunpack.c.l.b16 %v569
    %v618 = vunpack.c.l.b16 %v570
    %v619 = vunpack.c.l.b16 %v571
    %v620 = vunpack.c.l.b16 %v572
    %v621 = vunpack.c.l.b16 %v573
    %v622 = vunpack.c.l.b16 %v574
    %v623 = vunpack.c.l.b16 %v575
    %v624 = vunpack.c.l.b16 %v576
    %v625 = vunpack.c.l.b16 %v577
    %v626 = vpack.c.b16 %v611, %v610
    %v627 = vpack.c.b16 %v613, %v612
    %v628 = vpack.c.b16 %v615, %v614
    %v629 = vpack.c.b16 %v617, %v616
    %v630 = vpack.c.b16 %v619, %v618
    %v631 = vpack.c.b16 %v621, %v620
    %v632 = vpack.c.b16 %v623, %v622
    %v633 = vpack.c.b16 %v625, %v624
    %v658 = vunpack.c.l.b16 %v578
    %v659 = vunpack.c.l.b16 %v579
    %v660 = vunpack.c.l.b16 %v580
    %v661 = vunpack.c.l.b16 %v581
    %v662 = vunpack.c.l.b16 %v582
    %v663 = vunpack.c.l.b16 %v583
    %v664 = vunpack.c.l.b16 %v584
    %v665 = vunpack.c.l.b16 %v585
    %v666 = vunpack.c.l.b16 %v586
    %v667 = vunpack.c.l.b16 %v587
    %v668 = vunpack.c.l.b16 %v588
    %v669 = vunpack.c.l.b16 %v589
    %v670 = vunpack.c.l.b16 %v590
    %v671 = vunpack.c.l.b16 %v591
    %v672 = vunpack.c.l.b16 %v592
    %v673 = vunpack.c.l.b16 %v593
    %v674 = vpack.c.b16 %v659, %v658
    %v675 = vpack.c.b16 %v661, %v660
    %v676 = vpack.c.b16 %v663, %v662
    %v677 = vpack.c.b16 %v665, %v664
    %v678 = vpack.c.b16 %v667, %v666
    %v679 = vpack.c.b16 %v669, %v668
    %v680 = vpack.c.b16 %v671, %v670
    %v681 = vpack.c.b16 %v673, %v672
    %690 = vmatprep.subr.bf16.mxu0 0
    %691 = vmatpush1.bf16.msra.mxu0 %v674
    %692 = vmatprep.subr.bf16.mxu0 0
    %693 = vmatpush1.bf16.msra.mxu0 %v675
    %694 = vmatprep.subr.bf16.mxu0 0
    %695 = vmatpush1.bf16.msra.mxu0 %v676
    %696 = vmatprep.subr.bf16.mxu0 0
    %697 = vmatpush1.bf16.msra.mxu0 %v677
    %698 = vmatprep.subr.bf16.mxu0 0
    %699 = vmatpush1.bf16.msra.mxu0 %v678
    %700 = vmatprep.subr.bf16.mxu0 0
    %701 = vmatpush1.bf16.msra.mxu0 %v679
    %702 = vmatprep.subr.bf16.mxu0 0
    %703 = vmatpush1.bf16.msra.mxu0 %v680
    %704 = vmatprep.subr.bf16.mxu0 0
    %705 = vmatpush1.bf16.msra.mxu0 %v681
    %706 = vmatprep.subr.bf16.mxu0 0
    %707 = vmatpush1.bf16.msra.mxu0 0
    %708 = vmatprep.subr.bf16.mxu0 0
    %709 = vmatpush1.bf16.msra.mxu0 0
    %710 = vmatprep.subr.bf16.mxu0 0
    %711 = vmatpush1.bf16.msra.mxu0 0
    %712 = vmatprep.subr.bf16.mxu0 0
    %713 = vmatpush1.bf16.msra.mxu0 0
    %714 = vmatprep.subr.bf16.mxu0 0
    %715 = vmatpush1.bf16.msra.mxu0 0
    %716 = vmatprep.subr.bf16.mxu0 0
    %717 = vmatpush1.bf16.msra.mxu0 0
    %718 = vmatprep.subr.bf16.mxu0 0
    %719 = vmatpush1.bf16.msra.mxu0 0
    %720 = vmatprep.subr.bf16.mxu0 0
    %721 = vmatpush1.bf16.msra.mxu0 0
    %722 = vmatprep.mubr.bf16.mxu0 0
    %723 = vmatmul.mubr.bf16.gmra.mrb[0].mxu0 %v626
    %v724 = vpop.f32.mrb[0].mxu0
    %v725 = vadd.f32 0.0, %v724
    %v726 = vpop.f32.mrb[0].mxu0
    %v727 = vpop.f32.mrb[0].mxu0
    %v728 = vadd.f32 0.0, %v727
    %v729 = vpop.f32.mrb[0].mxu0
    %730 = vmatprep.mubr.bf16.mxu0 0
    %731 = vmatmul.mubr.bf16.gmra.mrb[0].mxu0 %v627
    %v732 = vpop.f32.mrb[0].mxu0
    %v733 = vadd.f32 0.0, %v732
    %v734 = vpop.f32.mrb[0].mxu0
    %v735 = vpop.f32.mrb[0].mxu0
    %v736 = vadd.f32 0.0, %v735
    %v737 = vpop.f32.mrb[0].mxu0
    %738 = vmatprep.mubr.bf16.mxu0 0
    %739 = vmatmul.mubr.bf16.gmra.mrb[0].mxu0 %v628
    %v740 = vpop.f32.mrb[0].mxu0
    %v741 = vadd.f32 0.0, %v740
    %v742 = vpop.f32.mrb[0].mxu0
    %v743 = vpop.f32.mrb[0].mxu0
    %v744 = vadd.f32 0.0, %v743
    %v745 = vpop.f32.mrb[0].mxu0
    %746 = vmatprep.mubr.bf16.mxu0 0
    %747 = vmatmul.mubr.bf16.gmra.mrb[0].mxu0 %v629
    %v748 = vpop.f32.mrb[0].mxu0
    %v749 = vadd.f32 0.0, %v748
    %v750 = vpop.f32.mrb[0].mxu0
    %v751 = vpop.f32.mrb[0].mxu0
    %v752 = vadd.f32 0.0, %v751
    %v753 = vpop.f32.mrb[0].mxu0
    %754 = vmatprep.mubr.bf16.mxu0 0
    %755 = vmatmul.mubr.bf16.gmra.mrb[0].mxu0 %v630
    %v756 = vpop.f32.mrb[0].mxu0
    %v757 = vadd.f32 0.0, %v756
    %v758 = vpop.f32.mrb[0].mxu0
    %v759 = vpop.f32.mrb[0].mxu0
    %v760 = vadd.f32 0.0, %v759
    %v761 = vpop.f32.mrb[0].mxu0
    %762 = vmatprep.mubr.bf16.mxu0 0
    %763 = vmatmul.mubr.bf16.gmra.mrb[0].mxu0 %v631
    %v764 = vpop.f32.mrb[0].mxu0
    %v765 = vadd.f32 0.0, %v764
    %v766 = vpop.f32.mrb[0].mxu0
    %v767 = vpop.f32.mrb[0].mxu0
    %v768 = vadd.f32 0.0, %v767
    %v769 = vpop.f32.mrb[0].mxu0
    %770 = vmatprep.mubr.bf16.mxu0 0
    %771 = vmatmul.mubr.bf16.gmra.mrb[0].mxu0 %v632
    %v772 = vpop.f32.mrb[0].mxu0
    %v773 = vadd.f32 0.0, %v772
    %v774 = vpop.f32.mrb[0].mxu0
    %v775 = vpop.f32.mrb[0].mxu0
    %v776 = vadd.f32 0.0, %v775
    %v777 = vpop.f32.mrb[0].mxu0
    %778 = vmatprep.mubr.bf16.mxu0 0
    %779 = vmatmul.mubr.bf16.gmra.mrb[0].mxu0 %v633
    %v780 = vpop.f32.mrb[0].mxu0
    %v781 = vadd.f32 0.0, %v780
    %v782 = vpop.f32.mrb[0].mxu0
    %v783 = vpop.f32.mrb[0].mxu0
    %v784 = vadd.f32 0.0, %v783
    %v785 = vpop.f32.mrb[0].mxu0
    %786 = vdwg.mxu0
    %v787 = vadd.f32 %v546, %v725
    %v788 = vadd.f32 %v547, %v728
    %v789 = vadd.f32 %v548, %v733
    %v790 = vadd.f32 %v549, %v736
    %v791 = vadd.f32 %v550, %v741
    %v792 = vadd.f32 %v551, %v744
    %v793 = vadd.f32 %v552, %v749
    %v794 = vadd.f32 %v553, %v752
    %v795 = vadd.f32 %v554, %v757
    %v796 = vadd.f32 %v555, %v760
    %v797 = vadd.f32 %v556, %v765
    %v798 = vadd.f32 %v557, %v768
    %v799 = vadd.f32 %v558, %v773
    %v800 = vadd.f32 %v559, %v776
    %v801 = vadd.f32 %v560, %v781
    %v802 = vadd.f32 %v561, %v784
    %803 = vst [vmem:[#allocation3] sm:$0xff] %v787
    %804 = vst [vmem:[#allocation3 + $0x8] sm:$0xff] %v788
    %805 = vst [vmem:[#allocation3 + $0x10] sm:$0xff] %v789
    %806 = vst [vmem:[#allocation3 + $0x18] sm:$0xff] %v790
    %807 = vst [vmem:[#allocation3 + $0x20] sm:$0xff] %v791
    %808 = vst [vmem:[#allocation3 + $0x28] sm:$0xff] %v792
    %809 = vst [vmem:[#allocation3 + $0x30] sm:$0xff] %v793
    %810 = vst [vmem:[#allocation3 + $0x38] sm:$0xff] %v794
    %811 = vst [vmem:[#allocation3 + $0x40] sm:$0xff] %v795
    %812 = vst [vmem:[#allocation3 + $0x48] sm:$0xff] %v796
    %813 = vst [vmem:[#allocation3 + $0x50] sm:$0xff] %v797
    %814 = vst [vmem:[#allocation3 + $0x58] sm:$0xff] %v798
    %815 = vst [vmem:[#allocation3 + $0x60] sm:$0xff] %v799
    %816 = vst [vmem:[#allocation3 + $0x68] sm:$0xff] %v800
    %817 = vst [vmem:[#allocation3 + $0x70] sm:$0xff] %v801
    %818 = vst [vmem:[#allocation3 + $0x78] sm:$0xff] %v802
  $region45: #{multi_gcn_forward.1} parent=0 // pred_fallthru
    _
  // Predicated region
  $region46: #{multi_gcn_forward.1} parent=0 // pred_check
    %p819 = pneg %p220
  $region47: #{multi_gcn_forward.1} parent=0 // pred_check_branch
    %821 = sbr.rel (%p819) target = $region49
  $region48: #{multi_gcn_forward.1} parent=0 // pred_region
    %v822 = vld [vmem:[#allocation2] sm:$0xff]
    %v823 = vld [vmem:[#allocation2 + $0x8] sm:$0xff]
    %v824 = vld [vmem:[#allocation2 + $0x10] sm:$0xff]
    %v825 = vld [vmem:[#allocation2 + $0x18] sm:$0xff]
    %v826 = vld [vmem:[#allocation2 + $0x20] sm:$0xff]
    %v827 = vld [vmem:[#allocation2 + $0x28] sm:$0xff]
    %v828 = vld [vmem:[#allocation2 + $0x30] sm:$0xff]
    %v829 = vld [vmem:[#allocation2 + $0x38] sm:$0xff]
    %v830 = vld [vmem:[#allocation2 + $0x40] sm:$0xff]
    %v831 = vld [vmem:[#allocation2 + $0x48] sm:$0xff]
    %v832 = vld [vmem:[#allocation2 + $0x50] sm:$0xff]
    %v833 = vld [vmem:[#allocation2 + $0x58] sm:$0xff]
    %v834 = vld [vmem:[#allocation2 + $0x60] sm:$0xff]
    %v835 = vld [vmem:[#allocation2 + $0x68] sm:$0xff]
    %v836 = vld [vmem:[#allocation2 + $0x70] sm:$0xff]
    %v837 = vld [vmem:[#allocation2 + $0x78] sm:$0xff]
    %v838 = vld [vmem:[%s5] sm:$0x1]
    %v840 = vlaneseq
    %v841 = vshrl.u32 %v840, 7
    %v842 = vsub.s32 0, %v841
    %v843 = vrot.slane %v838, %v842
    %v845 = vadd.f32 %v822, %v843
    %v846 = vadd.f32 %v823, %v843
    %v847 = vadd.f32 %v824, %v843
    %v848 = vadd.f32 %v825, %v843
    %v849 = vadd.f32 %v826, %v843
    %v850 = vadd.f32 %v827, %v843
    %v851 = vadd.f32 %v828, %v843
    %v852 = vadd.f32 %v829, %v843
    %v853 = vadd.f32 %v830, %v843
    %v854 = vadd.f32 %v831, %v843
    %v855 = vadd.f32 %v832, %v843
    %v856 = vadd.f32 %v833, %v843
    %v857 = vadd.f32 %v834, %v843
    %v858 = vadd.f32 %v835, %v843
    %v859 = vadd.f32 %v836, %v843
    %v860 = vadd.f32 %v837, %v843
    %v861 = vmax.f32 %v845, 0.0
    %v862 = vmax.f32 %v846, 0.0
    %v863 = vmax.f32 %v847, 0.0
    %v864 = vmax.f32 %v848, 0.0
    %v865 = vmax.f32 %v849, 0.0
    %v866 = vmax.f32 %v850, 0.0
    %v867 = vmax.f32 %v851, 0.0
    %v868 = vmax.f32 %v852, 0.0
    %v869 = vmax.f32 %v853, 0.0
    %v870 = vmax.f32 %v854, 0.0
    %v871 = vmax.f32 %v855, 0.0
    %v872 = vmax.f32 %v856, 0.0
    %v873 = vmax.f32 %v857, 0.0
    %v874 = vmax.f32 %v858, 0.0
    %v875 = vmax.f32 %v859, 0.0
    %v876 = vmax.f32 %v860, 0.0
    %v877 = vld [vmem:[#allocation3] sm:$0xff]
    %v878 = vld [vmem:[#allocation3 + $0x8] sm:$0xff]
    %v879 = vld [vmem:[#allocation3 + $0x10] sm:$0xff]
    %v880 = vld [vmem:[#allocation3 + $0x18] sm:$0xff]
    %v881 = vld [vmem:[#allocation3 + $0x20] sm:$0xff]
    %v882 = vld [vmem:[#allocation3 + $0x28] sm:$0xff]
    %v883 = vld [vmem:[#allocation3 + $0x30] sm:$0xff]
    %v884 = vld [vmem:[#allocation3 + $0x38] sm:$0xff]
    %v885 = vld [vmem:[#allocation3 + $0x40] sm:$0xff]
    %v886 = vld [vmem:[#allocation3 + $0x48] sm:$0xff]
    %v887 = vld [vmem:[#allocation3 + $0x50] sm:$0xff]
    %v888 = vld [vmem:[#allocation3 + $0x58] sm:$0xff]
    %v889 = vld [vmem:[#allocation3 + $0x60] sm:$0xff]
    %v890 = vld [vmem:[#allocation3 + $0x68] sm:$0xff]
    %v891 = vld [vmem:[#allocation3 + $0x70] sm:$0xff]
    %v892 = vld [vmem:[#allocation3 + $0x78] sm:$0xff]
    %v893 = vld [vmem:[%s6] sm:$0x1]
    %v895 = vlaneseq
    %v896 = vshrl.u32 %v895, 7
    %v897 = vsub.s32 0, %v896
    %v898 = vrot.slane %v893, %v897
    %v900 = vadd.f32 %v877, %v898
    %v901 = vadd.f32 %v878, %v898
    %v902 = vadd.f32 %v879, %v898
    %v903 = vadd.f32 %v880, %v898
    %v904 = vadd.f32 %v881, %v898
    %v905 = vadd.f32 %v882, %v898
    %v906 = vadd.f32 %v883, %v898
    %v907 = vadd.f32 %v884, %v898
    %v908 = vadd.f32 %v885, %v898
    %v909 = vadd.f32 %v886, %v898
    %v910 = vadd.f32 %v887, %v898
    %v911 = vadd.f32 %v888, %v898
    %v912 = vadd.f32 %v889, %v898
    %v913 = vadd.f32 %v890, %v898
    %v914 = vadd.f32 %v891, %v898
    %v915 = vadd.f32 %v892, %v898
    %v916 = vmax.f32 %v900, 0.0
    %v917 = vmax.f32 %v901, 0.0
    %v918 = vmax.f32 %v902, 0.0
    %v919 = vmax.f32 %v903, 0.0
    %v920 = vmax.f32 %v904, 0.0
    %v921 = vmax.f32 %v905, 0.0
    %v922 = vmax.f32 %v906, 0.0
    %v923 = vmax.f32 %v907, 0.0
    %v924 = vmax.f32 %v908, 0.0
    %v925 = vmax.f32 %v909, 0.0
    %v926 = vmax.f32 %v910, 0.0
    %v927 = vmax.f32 %v911, 0.0
    %v928 = vmax.f32 %v912, 0.0
    %v929 = vmax.f32 %v913, 0.0
    %v930 = vmax.f32 %v914, 0.0
    %v931 = vmax.f32 %v915, 0.0
    %v932 = vld [vmem:[%s7] sm:$0xff]
    %v933 = vld [vmem:[%s7 + $0x8] sm:$0xff]
    %v934 = vld [vmem:[%s7 + $0x10] sm:$0xff]
    %v935 = vld [vmem:[%s7 + $0x18] sm:$0xff]
    %v936 = vld [vmem:[%s7 + $0x20] sm:$0xff]
    %v937 = vld [vmem:[%s7 + $0x28] sm:$0xff]
    %v938 = vld [vmem:[%s7 + $0x30] sm:$0xff]
    %v939 = vld [vmem:[%s7 + $0x38] sm:$0xff]
    %v940 = vld [vmem:[%s7 + $0x40] sm:$0xff]
    %v941 = vld [vmem:[%s7 + $0x48] sm:$0xff]
    %v942 = vld [vmem:[%s7 + $0x50] sm:$0xff]
    %v943 = vld [vmem:[%s7 + $0x58] sm:$0xff]
    %v944 = vld [vmem:[%s7 + $0x60] sm:$0xff]
    %v945 = vld [vmem:[%s7 + $0x68] sm:$0xff]
    %v946 = vld [vmem:[%s7 + $0x70] sm:$0xff]
    %v947 = vld [vmem:[%s7 + $0x78] sm:$0xff]
    %v948 = vld [vmem:[%s7 + $0x80] sm:$0xff]
    %v949 = vld [vmem:[%s7 + $0x88] sm:$0xff]
    %v950 = vld [vmem:[%s7 + $0x90] sm:$0xff]
    %v951 = vld [vmem:[%s7 + $0x98] sm:$0xff]
    %v952 = vld [vmem:[%s7 + $0xa0] sm:$0xff]
    %v953 = vld [vmem:[%s7 + $0xa8] sm:$0xff]
    %v954 = vld [vmem:[%s7 + $0xb0] sm:$0xff]
    %v955 = vld [vmem:[%s7 + $0xb8] sm:$0xff]
    %v956 = vld [vmem:[%s7 + $0xc0] sm:$0xff]
    %v957 = vld [vmem:[%s7 + $0xc8] sm:$0xff]
    %v958 = vld [vmem:[%s7 + $0xd0] sm:$0xff]
    %v959 = vld [vmem:[%s7 + $0xd8] sm:$0xff]
    %v960 = vld [vmem:[%s7 + $0xe0] sm:$0xff]
    %v961 = vld [vmem:[%s7 + $0xe8] sm:$0xff]
    %v962 = vld [vmem:[%s7 + $0xf0] sm:$0xff]
    %v963 = vld [vmem:[%s7 + $0xf8] sm:$0xff]
    %v964 = vld [vmem:[%s8] sm:$0x1]
    %v966 = vlaneseq
    %v967 = vshrl.u32 %v966, 7
    %v968 = vsub.s32 0, %v967
    %v969 = vrot.slane %v964, %v968
    %971 = vmatprep.subr.mxu0 0.0
    %972 = vmatpush1.msra.mxu0 %v932
    %973 = vmatprep.subr.mxu0 0.0
    %974 = vmatpush1.msra.mxu0 %v933
    %975 = vmatprep.subr.mxu0 0.0
    %976 = vmatpush1.msra.mxu0 %v934
    %977 = vmatprep.subr.mxu0 0.0
    %978 = vmatpush1.msra.mxu0 %v935
    %979 = vmatprep.subr.mxu0 0.0
    %980 = vmatpush1.msra.mxu0 %v936
    %981 = vmatprep.subr.mxu0 0.0
    %982 = vmatpush1.msra.mxu0 %v937
    %983 = vmatprep.subr.mxu0 0.0
    %984 = vmatpush1.msra.mxu0 %v938
    %985 = vmatprep.subr.mxu0 0.0
    %986 = vmatpush1.msra.mxu0 %v939
    %987 = vmatprep.subr.mxu0 0.0
    %988 = vmatpush1.msra.mxu0 %v940
    %989 = vmatprep.subr.mxu0 0.0
    %990 = vmatpush1.msra.mxu0 %v941
    %991 = vmatprep.subr.mxu0 0.0
    %992 = vmatpush1.msra.mxu0 %v942
    %993 = vmatprep.subr.mxu0 0.0
    %994 = vmatpush1.msra.mxu0 %v943
    %995 = vmatprep.subr.mxu0 0.0
    %996 = vmatpush1.msra.mxu0 %v944
    %997 = vmatprep.subr.mxu0 0.0
    %998 = vmatpush1.msra.mxu0 %v945
    %999 = vmatprep.subr.mxu0 0.0
    %1000 = vmatpush1.msra.mxu0 %v946
    %1001 = vmatprep.subr.mxu0 0.0
    %1002 = vmatpush1.msra.mxu0 %v947
    %1003 = vmatprep.subr.mxu0 0.0
    %1004 = vmatpush1.msra.mxu0 %v948
    %1005 = vmatprep.subr.mxu0 0.0
    %1006 = vmatpush1.msra.mxu0 %v949
    %1007 = vmatprep.subr.mxu0 0.0
    %1008 = vmatpush1.msra.mxu0 %v950
    %1009 = vmatprep.subr.mxu0 0.0
    %1010 = vmatpush1.msra.mxu0 %v951
    %1011 = vmatprep.subr.mxu0 0.0
    %1012 = vmatpush1.msra.mxu0 %v952
    %1013 = vmatprep.subr.mxu0 0.0
    %1014 = vmatpush1.msra.mxu0 %v953
    %1015 = vmatprep.subr.mxu0 0.0
    %1016 = vmatpush1.msra.mxu0 %v954
    %1017 = vmatprep.subr.mxu0 0.0
    %1018 = vmatpush1.msra.mxu0 %v955
    %1019 = vmatprep.subr.mxu0 0.0
    %1020 = vmatpush1.msra.mxu0 %v956
    %1021 = vmatprep.subr.mxu0 0.0
    %1022 = vmatpush1.msra.mxu0 %v957
    %1023 = vmatprep.subr.mxu0 0.0
    %1024 = vmatpush1.msra.mxu0 %v958
    %1025 = vmatprep.subr.mxu0 0.0
    %1026 = vmatpush1.msra.mxu0 %v959
    %1027 = vmatprep.subr.mxu0 0.0
    %1028 = vmatpush1.msra.mxu0 %v960
    %1029 = vmatprep.subr.mxu0 0.0
    %1030 = vmatpush1.msra.mxu0 %v961
    %1031 = vmatprep.subr.mxu0 0.0
    %1032 = vmatpush1.msra.mxu0 %v962
    %1033 = vmatprep.subr.mxu0 0.0
    %1034 = vmatpush1.msra.mxu0 %v963
    %1035 = vmatprep.mubr.f32.mxu0 %v916
    %1036 = vmatmul.mubr.f32.gmra.mrb[0].mxu0 %v861
    %v1037 = vpop.f32.mrb[0].mxu0
    %v1038 = vadd.f32 %v969, %v1037
    %v1039 = vpop.f32.mrb[0].mxu0
    %1040 = vmatprep.mubr.f32.mxu0 %v917
    %1041 = vmatmul.mubr.f32.gmra.mrb[0].mxu0 %v862
    %v1042 = vpop.f32.mrb[0].mxu0
    %v1043 = vadd.f32 %v969, %v1042
    %v1044 = vpop.f32.mrb[0].mxu0
    %1045 = vmatprep.mubr.f32.mxu0 %v918
    %1046 = vmatmul.mubr.f32.gmra.mrb[0].mxu0 %v863
    %v1047 = vpop.f32.mrb[0].mxu0
    %v1048 = vadd.f32 %v969, %v1047
    %v1049 = vpop.f32.mrb[0].mxu0
    %1050 = vmatprep.mubr.f32.mxu0 %v919
    %1051 = vmatmul.mubr.f32.gmra.mrb[0].mxu0 %v864
    %v1052 = vpop.f32.mrb[0].mxu0
    %v1053 = vadd.f32 %v969, %v1052
    %v1054 = vpop.f32.mrb[0].mxu0
    %1055 = vmatprep.mubr.f32.mxu0 %v920
    %1056 = vmatmul.mubr.f32.gmra.mrb[0].mxu0 %v865
    %v1057 = vpop.f32.mrb[0].mxu0
    %v1058 = vadd.f32 %v969, %v1057
    %v1059 = vpop.f32.mrb[0].mxu0
    %1060 = vmatprep.mubr.f32.mxu0 %v921
    %1061 = vmatmul.mubr.f32.gmra.mrb[0].mxu0 %v866
    %v1062 = vpop.f32.mrb[0].mxu0
    %v1063 = vadd.f32 %v969, %v1062
    %v1064 = vpop.f32.mrb[0].mxu0
    %1065 = vmatprep.mubr.f32.mxu0 %v922
    %1066 = vmatmul.mubr.f32.gmra.mrb[0].mxu0 %v867
    %v1067 = vpop.f32.mrb[0].mxu0
    %v1068 = vadd.f32 %v969, %v1067
    %v1069 = vpop.f32.mrb[0].mxu0
    %1070 = vmatprep.mubr.f32.mxu0 %v923
    %1071 = vmatmul.mubr.f32.gmra.mrb[0].mxu0 %v868
    %v1072 = vpop.f32.mrb[0].mxu0
    %v1073 = vadd.f32 %v969, %v1072
    %v1074 = vpop.f32.mrb[0].mxu0
    %1075 = vmatprep.mubr.f32.mxu0 %v924
    %1076 = vmatmul.mubr.f32.gmra.mrb[0].mxu0 %v869
    %v1077 = vpop.f32.mrb[0].mxu0
    %v1078 = vadd.f32 %v969, %v1077
    %v1079 = vpop.f32.mrb[0].mxu0
    %1080 = vmatprep.mubr.f32.mxu0 %v925
    %1081 = vmatmul.mubr.f32.gmra.mrb[0].mxu0 %v870
    %v1082 = vpop.f32.mrb[0].mxu0
    %v1083 = vadd.f32 %v969, %v1082
    %v1084 = vpop.f32.mrb[0].mxu0
    %1085 = vmatprep.mubr.f32.mxu0 %v926
    %1086 = vmatmul.mubr.f32.gmra.mrb[0].mxu0 %v871
    %v1087 = vpop.f32.mrb[0].mxu0
    %v1088 = vadd.f32 %v969, %v1087
    %v1089 = vpop.f32.mrb[0].mxu0
    %1090 = vmatprep.mubr.f32.mxu0 %v927
    %1091 = vmatmul.mubr.f32.gmra.mrb[0].mxu0 %v872
    %v1092 = vpop.f32.mrb[0].mxu0
    %v1093 = vadd.f32 %v969, %v1092
    %v1094 = vpop.f32.mrb[0].mxu0
    %1095 = vmatprep.mubr.f32.mxu0 %v928
    %1096 = vmatmul.mubr.f32.gmra.mrb[0].mxu0 %v873
    %v1097 = vpop.f32.mrb[0].mxu0
    %v1098 = vadd.f32 %v969, %v1097
    %v1099 = vpop.f32.mrb[0].mxu0
    %1100 = vmatprep.mubr.f32.mxu0 %v929
    %1101 = vmatmul.mubr.f32.gmra.mrb[0].mxu0 %v874
    %v1102 = vpop.f32.mrb[0].mxu0
    %v1103 = vadd.f32 %v969, %v1102
    %v1104 = vpop.f32.mrb[0].mxu0
    %1105 = vmatprep.mubr.f32.mxu0 %v930
    %1106 = vmatmul.mubr.f32.gmra.mrb[0].mxu0 %v875
    %v1107 = vpop.f32.mrb[0].mxu0
    %v1108 = vadd.f32 %v969, %v1107
    %v1109 = vpop.f32.mrb[0].mxu0
    %1110 = vmatprep.mubr.f32.mxu0 %v931
    %1111 = vmatmul.mubr.f32.gmra.mrb[0].mxu0 %v876
    %v1112 = vpop.f32.mrb[0].mxu0
    %v1113 = vadd.f32 %v969, %v1112
    %v1114 = vpop.f32.mrb[0].mxu0
    %1115 = vdwg.mxu0
    %v1116 = vlaneseq
    %v1117 = vand.u32 %v1116, 127
    %vm1118 = vcmp.lt.s32.totalorder %v1117, 4
    %v1119 = vsel %vm1118, %v1038, -1e+30
    %v1120 = vsel %vm1118, %v1043, -1e+30
    %v1121 = vsel %vm1118, %v1048, -1e+30
    %v1122 = vsel %vm1118, %v1053, -1e+30
    %v1123 = vsel %vm1118, %v1058, -1e+30
    %v1124 = vsel %vm1118, %v1063, -1e+30
    %v1125 = vsel %vm1118, %v1068, -1e+30
    %v1126 = vsel %vm1118, %v1073, -1e+30
    %v1127 = vsel %vm1118, %v1078, -1e+30
    %v1128 = vsel %vm1118, %v1083, -1e+30
    %v1129 = vsel %vm1118, %v1088, -1e+30
    %v1130 = vsel %vm1118, %v1093, -1e+30
    %v1131 = vsel %vm1118, %v1098, -1e+30
    %v1132 = vsel %vm1118, %v1103, -1e+30
    %v1133 = vsel %vm1118, %v1108, -1e+30
    %v1134 = vsel %vm1118, %v1113, -1e+30
    %1135 = vmax.xlane.f32.xlu0 %v1119
    %v1136 = vpop.xlane.xlu0 %1135
    %1137 = vmax.xlane.f32.xlu0 %v1120
    %v1138 = vpop.xlane.xlu0 %1137
    %1139 = vmax.xlane.f32.xlu0 %v1121
    %v1140 = vpop.xlane.xlu0 %1139
    %1141 = vmax.xlane.f32.xlu0 %v1122
    %v1142 = vpop.xlane.xlu0 %1141
    %1143 = vmax.xlane.f32.xlu0 %v1123
    %v1144 = vpop.xlane.xlu0 %1143
    %1145 = vmax.xlane.f32.xlu0 %v1124
    %v1146 = vpop.xlane.xlu0 %1145
    %1147 = vmax.xlane.f32.xlu0 %v1125
    %v1148 = vpop.xlane.xlu0 %1147
    %1149 = vmax.xlane.f32.xlu0 %v1126
    %v1150 = vpop.xlane.xlu0 %1149
    %1151 = vmax.xlane.f32.xlu0 %v1127
    %v1152 = vpop.xlane.xlu0 %1151
    %1153 = vmax.xlane.f32.xlu0 %v1128
    %v1154 = vpop.xlane.xlu0 %1153
    %1155 = vmax.xlane.f32.xlu0 %v1129
    %v1156 = vpop.xlane.xlu0 %1155
    %1157 = vmax.xlane.f32.xlu0 %v1130
    %v1158 = vpop.xlane.xlu0 %1157
    %1159 = vmax.xlane.f32.xlu0 %v1131
    %v1160 = vpop.xlane.xlu0 %1159
    %1161 = vmax.xlane.f32.xlu0 %v1132
    %v1162 = vpop.xlane.xlu0 %1161
    %1163 = vmax.xlane.f32.xlu0 %v1133
    %v1164 = vpop.xlane.xlu0 %1163
    %1165 = vmax.xlane.f32.xlu0 %v1134
    %v1166 = vpop.xlane.xlu0 %1165
    %v1167 = vsub.f32 %v1119, %v1136
    %v1168 = vsub.f32 %v1120, %v1138
    %v1169 = vsub.f32 %v1121, %v1140
    %v1170 = vsub.f32 %v1122, %v1142
    %v1171 = vsub.f32 %v1123, %v1144
    %v1172 = vsub.f32 %v1124, %v1146
    %v1173 = vsub.f32 %v1125, %v1148
    %v1174 = vsub.f32 %v1126, %v1150
    %v1175 = vsub.f32 %v1127, %v1152
    %v1176 = vsub.f32 %v1128, %v1154
    %v1177 = vsub.f32 %v1129, %v1156
    %v1178 = vsub.f32 %v1130, %v1158
    %v1179 = vsub.f32 %v1131, %v1160
    %v1180 = vsub.f32 %v1132, %v1162
    %v1181 = vsub.f32 %v1133, %v1164
    %v1182 = vsub.f32 %v1134, %v1166
    %v1183 = vmul.f32 %v1167, 1.442695
    %v1184 = vpow.pop %v1183
    %v1185 = vmul.f32 %v1168, 1.442695
    %v1186 = vpow.pop %v1185
    %v1187 = vmul.f32 %v1169, 1.442695
    %v1188 = vpow.pop %v1187
    %v1189 = vmul.f32 %v1170, 1.442695
    %v1190 = vpow.pop %v1189
    %v1191 = vmul.f32 %v1171, 1.442695
    %v1192 = vpow.pop %v1191
    %v1193 = vmul.f32 %v1172, 1.442695
    %v1194 = vpow.pop %v1193
    %v1195 = vmul.f32 %v1173, 1.442695
    %v1196 = vpow.pop %v1195
    %v1197 = vmul.f32 %v1174, 1.442695
    %v1198 = vpow.pop %v1197
    %v1199 = vmul.f32 %v1175, 1.442695
    %v1200 = vpow.pop %v1199
    %v1201 = vmul.f32 %v1176, 1.442695
    %v1202 = vpow.pop %v1201
    %v1203 = vmul.f32 %v1177, 1.442695
    %v1204 = vpow.pop %v1203
    %v1205 = vmul.f32 %v1178, 1.442695
    %v1206 = vpow.pop %v1205
    %v1207 = vmul.f32 %v1179, 1.442695
    %v1208 = vpow.pop %v1207
    %v1209 = vmul.f32 %v1180, 1.442695
    %v1210 = vpow.pop %v1209
    %v1211 = vmul.f32 %v1181, 1.442695
    %v1212 = vpow.pop %v1211
    %v1213 = vmul.f32 %v1182, 1.442695
    %v1214 = vpow.pop %v1213
    %1215 = vadd.xlane.f32.xlu0 %v1184
    %v1216 = vpop.xlane.xlu0 %1215
    %1217 = vadd.xlane.f32.xlu0 %v1186
    %v1218 = vpop.xlane.xlu0 %1217
    %1219 = vadd.xlane.f32.xlu0 %v1188
    %v1220 = vpop.xlane.xlu0 %1219
    %1221 = vadd.xlane.f32.xlu0 %v1190
    %v1222 = vpop.xlane.xlu0 %1221
    %1223 = vadd.xlane.f32.xlu0 %v1192
    %v1224 = vpop.xlane.xlu0 %1223
    %1225 = vadd.xlane.f32.xlu0 %v1194
    %v1226 = vpop.xlane.xlu0 %1225
    %1227 = vadd.xlane.f32.xlu0 %v1196
    %v1228 = vpop.xlane.xlu0 %1227
    %1229 = vadd.xlane.f32.xlu0 %v1198
    %v1230 = vpop.xlane.xlu0 %1229
    %1231 = vadd.xlane.f32.xlu0 %v1200
    %v1232 = vpop.xlane.xlu0 %1231
    %1233 = vadd.xlane.f32.xlu0 %v1202
    %v1234 = vpop.xlane.xlu0 %1233
    %1235 = vadd.xlane.f32.xlu0 %v1204
    %v1236 = vpop.xlane.xlu0 %1235
    %1237 = vadd.xlane.f32.xlu0 %v1206
    %v1238 = vpop.xlane.xlu0 %1237
    %1239 = vadd.xlane.f32.xlu0 %v1208
    %v1240 = vpop.xlane.xlu0 %1239
    %1241 = vadd.xlane.f32.xlu0 %v1210
    %v1242 = vpop.xlane.xlu0 %1241
    %1243 = vadd.xlane.f32.xlu0 %v1212
    %v1244 = vpop.xlane.xlu0 %1243
    %1245 = vadd.xlane.f32.xlu0 %v1214
    %v1246 = vpop.xlane.xlu0 %1245
    %v1247 = vlog2.pop %v1216
    %v1248 = vmul.f32 %v1247, 0.6931472
    %v1249 = vlog2.pop %v1218
    %v1250 = vmul.f32 %v1249, 0.6931472
    %v1251 = vlog2.pop %v1220
    %v1252 = vmul.f32 %v1251, 0.6931472
    %v1253 = vlog2.pop %v1222
    %v1254 = vmul.f32 %v1253, 0.6931472
    %v1255 = vlog2.pop %v1224
    %v1256 = vmul.f32 %v1255, 0.6931472
    %v1257 = vlog2.pop %v1226
    %v1258 = vmul.f32 %v1257, 0.6931472
    %v1259 = vlog2.pop %v1228
    %v1260 = vmul.f32 %v1259, 0.6931472
    %v1261 = vlog2.pop %v1230
    %v1262 = vmul.f32 %v1261, 0.6931472
    %v1263 = vlog2.pop %v1232
    %v1264 = vmul.f32 %v1263, 0.6931472
    %v1265 = vlog2.pop %v1234
    %v1266 = vmul.f32 %v1265, 0.6931472
    %v1267 = vlog2.pop %v1236
    %v1268 = vmul.f32 %v1267, 0.6931472
    %v1269 = vlog2.pop %v1238
    %v1270 = vmul.f32 %v1269, 0.6931472
    %v1271 = vlog2.pop %v1240
    %v1272 = vmul.f32 %v1271, 0.6931472
    %v1273 = vlog2.pop %v1242
    %v1274 = vmul.f32 %v1273, 0.6931472
    %v1275 = vlog2.pop %v1244
    %v1276 = vmul.f32 %v1275, 0.6931472
    %v1277 = vlog2.pop %v1246
    %v1278 = vmul.f32 %v1277, 0.6931472
    %v1279 = vsub.f32 %v1167, %v1248
    %v1280 = vsub.f32 %v1168, %v1250
    %v1281 = vsub.f32 %v1169, %v1252
    %v1282 = vsub.f32 %v1170, %v1254
    %v1283 = vsub.f32 %v1171, %v1256
    %v1284 = vsub.f32 %v1172, %v1258
    %v1285 = vsub.f32 %v1173, %v1260
    %v1286 = vsub.f32 %v1174, %v1262
    %v1287 = vsub.f32 %v1175, %v1264
    %v1288 = vsub.f32 %v1176, %v1266
    %v1289 = vsub.f32 %v1177, %v1268
    %v1290 = vsub.f32 %v1178, %v1270
    %v1291 = vsub.f32 %v1179, %v1272
    %v1292 = vsub.f32 %v1180, %v1274
    %v1293 = vsub.f32 %v1181, %v1276
    %v1294 = vsub.f32 %v1182, %v1278
    %1295 = vst [vmem:[%s9] sm:$0xff] %v1279
    %1296 = vst [vmem:[%s9 + $0x8] sm:$0xff] %v1280
    %1297 = vst [vmem:[%s9 + $0x10] sm:$0xff] %v1281
    %1298 = vst [vmem:[%s9 + $0x18] sm:$0xff] %v1282
    %1299 = vst [vmem:[%s9 + $0x20] sm:$0xff] %v1283
    %1300 = vst [vmem:[%s9 + $0x28] sm:$0xff] %v1284
    %1301 = vst [vmem:[%s9 + $0x30] sm:$0xff] %v1285
    %1302 = vst [vmem:[%s9 + $0x38] sm:$0xff] %v1286
    %1303 = vst [vmem:[%s9 + $0x40] sm:$0xff] %v1287
    %1304 = vst [vmem:[%s9 + $0x48] sm:$0xff] %v1288
    %1305 = vst [vmem:[%s9 + $0x50] sm:$0xff] %v1289
    %1306 = vst [vmem:[%s9 + $0x58] sm:$0xff] %v1290
    %1307 = vst [vmem:[%s9 + $0x60] sm:$0xff] %v1291
    %1308 = vst [vmem:[%s9 + $0x68] sm:$0xff] %v1292
    %1309 = vst [vmem:[%s9 + $0x70] sm:$0xff] %v1293
    %1310 = vst [vmem:[%s9 + $0x78] sm:$0xff] %v1294
  $region49: #{multi_gcn_forward.1} parent=0 // pred_fallthru
    _
  // Predicated region
  $region50: #{multi_gcn_forward.1} parent=0 // pred_check
    _
  $region51: #{multi_gcn_forward.1} parent=0 // pred_check_branch
    %1312 = sbr.rel (0) target = $region53
  $region52: #{multi_gcn_forward.1} parent=0 // pred_region
    _
  $region53: #{multi_gcn_forward.1} parent=0 // pred_fallthru
    _
  // Predicated region
  $region54: #{multi_gcn_forward.1} parent=0 // pred_check
    _
  $region55: #{multi_gcn_forward.1} parent=0 // pred_check_branch
    %1314 = sbr.rel (0) target = $region57
  $region56: #{multi_gcn_forward.1} parent=0 // pred_region
    _
  $region57: #{multi_gcn_forward.1} parent=0 // pred_fallthru
    _

</llo_original>
